<compile_context>
chip_gen: v6e
topology: v6e:2x2x1
jax: 0.10.0
libtpu: 0.0.40
codegen_flags: <defaults>
</compile_context>

<pallas_src>
import jax
import jax.numpy as jnp
from jax.experimental import pallas as pl
from jax.experimental.pallas import tpu as pltpu

GIN_EPS = 0.0     # GINConv default eps (train_eps=False)
BN_EPS = 1e-5     # nn.BatchNorm1d default eps
F_PAD = 128       # pad molhiv's 9 input features to a full lane width
HEAD_H = 128      # lin1 hidden width
OUT_PAD = 128     # lane-dense padded output width for lin2 (real result = column 0)
SUB = 8           # sublane granule


def _round_up(n, m):
    return (n + m - 1) // m * m


# ---------------------------------------------------------------------------
# Single fused kernel:
#   x1 = MLP1((1+eps)x  + A x ) ; x2 = MLP2((1+eps)x1 + A x1) ;
#   x3 = MLP3((1+eps)x2 + A x2)
#   g_k = P @ x_k (global mean pool) ; h = relu(cat(g1,g2,g3) @ Wl1 + bl1)
#   out = h @ Wl2_pad + bl2_pad   (lane-dense, column 0 is the real logit)
#   cat(...) @ Wl1 is rewritten as g1@Wl1[:64] + g2@Wl1[64:128] + g3@Wl1[128:].
# ---------------------------------------------------------------------------
def _gin_fused_kernel(
        x_ref, adj_ref, pool_ref,
        w1a_ref, b1a_ref, w2a_ref, b2a_ref,     # conv1 MLP (BN folded into w1/b1)
        w1b_ref, b1b_ref, w2b_ref, b2b_ref,     # conv2 MLP
        w1c_ref, b1c_ref, w2c_ref, b2c_ref,     # conv3 MLP
        l1a_ref, l1b_ref, l1c_ref, bl1_ref,     # lin1 (row-split weight) + bias
        wl2_ref, bl2_ref,                       # lin2, zero-padded to OUT_PAD lanes
        out_ref):
    adj = adj_ref[...]

    def conv(x, w1_ref, b1_ref, w2_ref, b2_ref):
        # neighbor-sum aggregation: agg[i] = sum over edges (j -> i) of x[j]
        agg = jnp.dot(adj, x, preferred_element_type=jnp.float32)
        h = (1.0 + GIN_EPS) * x + agg
        # Linear (+ folded BatchNorm) -> ReLU -> Linear
        z = jnp.dot(h, w1_ref[...], preferred_element_type=jnp.float32) + b1_ref[...]
        z = jnp.maximum(z, 0.0)
        return jnp.dot(z, w2_ref[...], preferred_element_type=jnp.float32) + b2_ref[...]

    x1 = conv(x_ref[...], w1a_ref, b1a_ref, w2a_ref, b2a_ref)
    x2 = conv(x1, w1b_ref, b1b_ref, w2b_ref, b2b_ref)
    x3 = conv(x2, w1c_ref, b1c_ref, w2c_ref, b2c_ref)

    # global_mean_pool as P @ x  (P[g, i] = 1/|V_g| for node i in graph g)
    P = pool_ref[...]
    g1 = jnp.dot(P, x1, preferred_element_type=jnp.float32)
    g2 = jnp.dot(P, x2, preferred_element_type=jnp.float32)
    g3 = jnp.dot(P, x3, preferred_element_type=jnp.float32)

    h = (jnp.dot(g1, l1a_ref[...], preferred_element_type=jnp.float32)
         + jnp.dot(g2, l1b_ref[...], preferred_element_type=jnp.float32)
         + jnp.dot(g3, l1c_ref[...], preferred_element_type=jnp.float32)
         + bl1_ref[...])
    h = jnp.maximum(h, 0.0)
    # dropout(p=0.5, training=False) -> identity
    out_ref[...] = (jnp.dot(h, wl2_ref[...], preferred_element_type=jnp.float32)
                    + bl2_ref[...])


# ---------------------------------------------------------------------------
# Parameter preparation: BN fold + padding (done once in the wrapper, not in
# the kernel hot path; runs as plain XLA ops outside the pallas_call).
# ---------------------------------------------------------------------------
def _fold_bn(w1, b1, gamma, beta, mean, var):
    s = gamma * jax.lax.rsqrt(var + BN_EPS)          # (1, H)
    return w1 * s, (b1 - mean) * s + beta


def prepare_params(params):
    prepared = {}
    for name in ("conv1", "conv2", "conv3"):
        p = params[name]
        w1, b1 = _fold_bn(p["w1"], p["b1"], p["gamma"], p["beta"], p["mean"], p["var"])
        prepared[name] = dict(w1=w1, b1=b1, w2=p["w2"], b2=p["b2"])
    # pad conv1's first linear from (F_IN, H) to (F_PAD, H) with zero rows
    w1 = prepared["conv1"]["w1"]
    prepared["conv1"]["w1"] = (
        jnp.zeros((F_PAD, w1.shape[1]), jnp.float32).at[: w1.shape[0]].set(w1))
    # pad lin2 (HEAD_H, 1) -> (HEAD_H, OUT_PAD) so the kernel store is lane-dense
    hp = params["head"]
    wl2 = jnp.zeros((HEAD_H, OUT_PAD), jnp.float32).at[:, :1].set(hp["w2"])
    bl2 = jnp.zeros((1, OUT_PAD), jnp.float32).at[:, :1].set(hp["b2"])
    prepared["head"] = dict(w1a=hp["w1a"], w1b=hp["w1b"], w1c=hp["w1c"],
                            b1=hp["b1"], w2=wl2, b2=bl2)
    return prepared


def gin_forward(x, adj, pool_mat, params):
    prepared = prepare_params(params)
    N, F_IN = x.shape
    G = pool_mat.shape[0]
    N_pad = _round_up(N, SUB)
    G_pad = _round_up(G, SUB)

    # zero-pad: nodes -> multiple of 8 sublanes, features -> full 128 lanes,
    # graphs -> multiple of 8 sublanes.  All identity w.r.t. the real rows.
    x_pad = jnp.zeros((N_pad, F_PAD), jnp.float32).at[:N, :F_IN].set(x)
    adj_pad = jnp.zeros((N_pad, N_pad), jnp.float32).at[:N, :N].set(adj)
    pool_pad = jnp.zeros((G_pad, N_pad), jnp.float32).at[:G, :N].set(pool_mat)

    c1, c2, c3, hd = prepared["conv1"], prepared["conv2"], prepared["conv3"], prepared["head"]
    args = (x_pad, adj_pad, pool_pad,
            c1["w1"], c1["b1"], c1["w2"], c1["b2"],
            c2["w1"], c2["b1"], c2["w2"], c2["b2"],
            c3["w1"], c3["b1"], c3["w2"], c3["b2"],
            hd["w1a"], hd["w1b"], hd["w1c"], hd["b1"], hd["w2"], hd["b2"])

    in_specs = [pl.BlockSpec(a.shape, lambda i: (0, 0)) for a in args]
    out_pad = pl.pallas_call(
        _gin_fused_kernel,
        out_shape=jax.ShapeDtypeStruct((G_pad, OUT_PAD), jnp.float32),
        grid=(1,),
        in_specs=in_specs,
        out_specs=pl.BlockSpec((G_pad, OUT_PAD), lambda i: (0, 0)),
        compiler_params=pltpu.CompilerParams(
            dimension_semantics=("arbitrary",)),
    )(*args)
    # real logits live in rows [:G], column 0 of the lane-dense padded output
    return out_pad[:G, :1]


# ---------------------------------------------------------------------------
# Parameter init (deterministic, mimics PyTorch Linear default U(-1/sqrt(fan_in),.))
# ---------------------------------------------------------------------------
def linear_init(key, fan_in, fan_out):
    kw, kb = jax.random.split(key)
    bound = 1.0 / float(fan_in) ** 0.5
    w = jax.random.uniform(kw, (fan_in, fan_out), jnp.float32, -bound, bound)
    b = jax.random.uniform(kb, (1, fan_out), jnp.float32, -bound, bound)
    return w, b


def gin_params(key, f_in, h):
    k1, k2 = jax.random.split(key)
    w1, b1 = linear_init(k1, f_in, h)
    w2, b2 = linear_init(k2, h, h)
    return dict(
        w1=w1, b1=b1, w2=w2, b2=b2,
        gamma=jnp.ones((1, h), jnp.float32), beta=jnp.zeros((1, h), jnp.float32),
        mean=jnp.zeros((1, h), jnp.float32), var=jnp.ones((1, h), jnp.float32),
    )


# Pure-JAX reference (same math, unfolded BN, no Pallas) for correctness check.
def _ref_layer(x, adj, p):
    h = (1.0 + GIN_EPS) * x + adj @ x
    z = h @ p["w1"] + p["b1"]
    z = (z - p["mean"]) / jnp.sqrt(p["var"] + BN_EPS) * p["gamma"] + p["beta"]
    z = jnp.maximum(z, 0.0)
    return z @ p["w2"] + p["b2"]


def _ref_forward(x, adj, pool_mat, params):
    x1 = _ref_layer(x, adj, params["conv1"])
    x2 = _ref_layer(x1, adj, params["conv2"])
    x3 = _ref_layer(x2, adj, params["conv3"])
    g = jnp.concatenate([pool_mat @ x1, pool_mat @ x2, pool_mat @ x3], axis=1)
    w1 = jnp.concatenate([params["head"]["w1a"], params["head"]["w1b"],
                          params["head"]["w1c"]], axis=0)
    h = jnp.maximum(g @ w1 + params["head"]["b1"], 0.0)
    return h @ params["head"]["w2"] + params["head"]["b2"]


if __name__ == "__main__":
    key = jax.random.PRNGKey(0)
    # nodes, in-features (molhiv has 9), hidden, graphs, edges
    N, F_IN, H, G, E = 32, 9, 64, 4, 64

    (k_x, k_src, k_dst, k_c1, k_c2, k_c3, k_l1, k_l2) = jax.random.split(key, 8)

    # node features
    x = jax.random.normal(k_x, (N, F_IN), jnp.float32)

    # random edge_index [2, E]; dense aggregation matrix adj[dst, src] = multiplicity
    src = jax.random.randint(k_src, (E,), 0, N)
    dst = jax.random.randint(k_dst, (E,), 0, N)
    adj = jnp.zeros((N, N), jnp.float32).at[dst, src].add(1.0)

    # batch assignment (which graph each node belongs to) and mean-pool matrix P[g, i]
    batch = jnp.repeat(jnp.arange(G), N // G)
    onehot = (jnp.arange(G)[:, None] == batch[None, :]).astype(jnp.float32)
    pool_mat = onehot / jnp.sum(onehot, axis=1, keepdims=True)

    # parameters (lin1: 192->128, lin2: 128->1)
    w_l1, b_l1 = linear_init(k_l1, 3 * H, HEAD_H)
    w_l2, b_l2 = linear_init(k_l2, HEAD_H, 1)
    params = dict(
        conv1=gin_params(k_c1, F_IN, H),
        conv2=gin_params(k_c2, H, H),
        conv3=gin_params(k_c3, H, H),
        head=dict(w1a=w_l1[:H], w1b=w_l1[H:2 * H], w1c=w_l1[2 * H:],
                  b1=b_l1, w2=w_l2, b2=b_l2),
    )

    out = jax.jit(gin_forward)(x, adj, pool_mat, params)
    out = jax.block_until_ready(out)

    ref = _ref_forward(x, adj, pool_mat, params)
    assert out.shape == (G, 1)
    assert jnp.allclose(out, ref, atol=1e-4, rtol=1e-4), (out, ref)

    print("KERNEL_OK")
</pallas_src>

<mosaic_0001>
module attributes {stable_mosaic.version = 11 : i64} {
  func.func @_gin_fused_kernel(%arg0: i32, %arg1: memref<32x128xf32, #tpu.memory_space<vmem>>, %arg2: memref<32x32xf32, #tpu.memory_space<vmem>>, %arg3: memref<8x32xf32, #tpu.memory_space<vmem>>, %arg4: memref<128x64xf32, #tpu.memory_space<vmem>>, %arg5: memref<1x64xf32, #tpu.memory_space<vmem>>, %arg6: memref<64x64xf32, #tpu.memory_space<vmem>>, %arg7: memref<1x64xf32, #tpu.memory_space<vmem>>, %arg8: memref<64x64xf32, #tpu.memory_space<vmem>>, %arg9: memref<1x64xf32, #tpu.memory_space<vmem>>, %arg10: memref<64x64xf32, #tpu.memory_space<vmem>>, %arg11: memref<1x64xf32, #tpu.memory_space<vmem>>, %arg12: memref<64x64xf32, #tpu.memory_space<vmem>>, %arg13: memref<1x64xf32, #tpu.memory_space<vmem>>, %arg14: memref<64x64xf32, #tpu.memory_space<vmem>>, %arg15: memref<1x64xf32, #tpu.memory_space<vmem>>, %arg16: memref<64x128xf32, #tpu.memory_space<vmem>>, %arg17: memref<64x128xf32, #tpu.memory_space<vmem>>, %arg18: memref<64x128xf32, #tpu.memory_space<vmem>>, %arg19: memref<1x128xf32, #tpu.memory_space<vmem>>, %arg20: memref<128x128xf32, #tpu.memory_space<vmem>>, %arg21: memref<1x128xf32, #tpu.memory_space<vmem>>, %arg22: memref<8x128xf32, #tpu.memory_space<vmem>>) attributes {dimension_semantics = [#tpu.dimension_semantics<arbitrary>], iteration_bounds = array<i64: 1>, scalar_prefetch = 0 : i64, scratch_operands = 0 : i64, tpu.core_type = #tpu.core_type<tc>, window_params = [{pipeline_mode = #tpu.pipeline_mode<synchronous>, transform_indices = @transform_0, window_bounds = array<i64: 32, 128>}, {pipeline_mode = #tpu.pipeline_mode<synchronous>, transform_indices = @transform_1, window_bounds = array<i64: 32, 32>}, {pipeline_mode = #tpu.pipeline_mode<synchronous>, transform_indices = @transform_2, window_bounds = array<i64: 8, 32>}, {pipeline_mode = #tpu.pipeline_mode<synchronous>, transform_indices = @transform_3, window_bounds = array<i64: 128, 64>}, {pipeline_mode = #tpu.pipeline_mode<synchronous>, transform_indices = @transform_4, window_bounds = array<i64: 1, 64>}, {pipeline_mode = #tpu.pipeline_mode<synchronous>, transform_indices = @transform_5, window_bounds = array<i64: 64, 64>}, {pipeline_mode = #tpu.pipeline_mode<synchronous>, transform_indices = @transform_6, window_bounds = array<i64: 1, 64>}, {pipeline_mode = #tpu.pipeline_mode<synchronous>, transform_indices = @transform_7, window_bounds = array<i64: 64, 64>}, {pipeline_mode = #tpu.pipeline_mode<synchronous>, transform_indices = @transform_8, window_bounds = array<i64: 1, 64>}, {pipeline_mode = #tpu.pipeline_mode<synchronous>, transform_indices = @transform_9, window_bounds = array<i64: 64, 64>}, {pipeline_mode = #tpu.pipeline_mode<synchronous>, transform_indices = @transform_10, window_bounds = array<i64: 1, 64>}, {pipeline_mode = #tpu.pipeline_mode<synchronous>, transform_indices = @transform_11, window_bounds = array<i64: 64, 64>}, {pipeline_mode = #tpu.pipeline_mode<synchronous>, transform_indices = @transform_12, window_bounds = array<i64: 1, 64>}, {pipeline_mode = #tpu.pipeline_mode<synchronous>, transform_indices = @transform_13, window_bounds = array<i64: 64, 64>}, {pipeline_mode = #tpu.pipeline_mode<synchronous>, transform_indices = @transform_14, window_bounds = array<i64: 1, 64>}, {pipeline_mode = #tpu.pipeline_mode<synchronous>, transform_indices = @transform_15, window_bounds = array<i64: 64, 128>}, {pipeline_mode = #tpu.pipeline_mode<synchronous>, transform_indices = @transform_16, window_bounds = array<i64: 64, 128>}, {pipeline_mode = #tpu.pipeline_mode<synchronous>, transform_indices = @transform_17, window_bounds = array<i64: 64, 128>}, {pipeline_mode = #tpu.pipeline_mode<synchronous>, transform_indices = @transform_18, window_bounds = array<i64: 1, 128>}, {pipeline_mode = #tpu.pipeline_mode<synchronous>, transform_indices = @transform_19, window_bounds = array<i64: 128, 128>}, {pipeline_mode = #tpu.pipeline_mode<synchronous>, transform_indices = @transform_20, window_bounds = array<i64: 1, 128>}, {pipeline_mode = #tpu.pipeline_mode<synchronous>, transform_indices = @transform_21, window_bounds = array<i64: 8, 128>}]} {
    %c0 = arith.constant 0 : index
    %c0_0 = arith.constant 0 : index
    %0 = vector.load %arg2[%c0, %c0_0] : memref<32x32xf32, #tpu.memory_space<vmem>>, vector<32x32xf32>
    %c0_1 = arith.constant 0 : index
    %c0_2 = arith.constant 0 : index
    %1 = vector.load %arg1[%c0_1, %c0_2] : memref<32x128xf32, #tpu.memory_space<vmem>>, vector<32x128xf32>
    %cst = arith.constant dense<0.000000e+00> : vector<32x128xf32>
    %2 = tpu.matmul %0, %1, %cst {dimension_numbers = #tpu.dot_dimension_numbers<[1], [0], [0], [1], [0, 0, 1, 1], [], []>} : vector<32x32xf32>, vector<32x128xf32>, vector<32x128xf32> -> vector<32x128xf32>
    %cst_3 = arith.constant 1.000000e+00 : f32
    %3 = vector.broadcast %cst_3 : f32 to vector<32x128xf32>
    %4 = arith.mulf %3, %1 : vector<32x128xf32>
    %5 = arith.addf %4, %2 : vector<32x128xf32>
    %c0_4 = arith.constant 0 : index
    %c0_5 = arith.constant 0 : index
    %6 = vector.load %arg4[%c0_4, %c0_5] : memref<128x64xf32, #tpu.memory_space<vmem>>, vector<128x64xf32>
    %cst_6 = arith.constant dense<0.000000e+00> : vector<32x64xf32>
    %7 = tpu.matmul %5, %6, %cst_6 {dimension_numbers = #tpu.dot_dimension_numbers<[1], [0], [0], [1], [0, 0, 1, 1], [], []>} : vector<32x128xf32>, vector<128x64xf32>, vector<32x64xf32> -> vector<32x64xf32>
    %c0_7 = arith.constant 0 : index
    %c0_8 = arith.constant 0 : index
    %8 = vector.load %arg5[%c0_7, %c0_8] : memref<1x64xf32, #tpu.memory_space<vmem>>, vector<1x64xf32>
    %9 = vector.broadcast %8 : vector<1x64xf32> to vector<32x64xf32>
    %10 = arith.addf %7, %9 : vector<32x64xf32>
    %cst_9 = arith.constant 0.000000e+00 : f32
    %11 = vector.broadcast %cst_9 : f32 to vector<32x64xf32>
    %12 = arith.maximumf %10, %11 : vector<32x64xf32>
    %c0_10 = arith.constant 0 : index
    %c0_11 = arith.constant 0 : index
    %13 = vector.load %arg6[%c0_10, %c0_11] : memref<64x64xf32, #tpu.memory_space<vmem>>, vector<64x64xf32>
    %cst_12 = arith.constant dense<0.000000e+00> : vector<32x64xf32>
    %14 = tpu.matmul %12, %13, %cst_12 {dimension_numbers = #tpu.dot_dimension_numbers<[1], [0], [0], [1], [0, 0, 1, 1], [], []>} : vector<32x64xf32>, vector<64x64xf32>, vector<32x64xf32> -> vector<32x64xf32>
    %c0_13 = arith.constant 0 : index
    %c0_14 = arith.constant 0 : index
    %15 = vector.load %arg7[%c0_13, %c0_14] : memref<1x64xf32, #tpu.memory_space<vmem>>, vector<1x64xf32>
    %16 = vector.broadcast %15 : vector<1x64xf32> to vector<32x64xf32>
    %17 = arith.addf %14, %16 : vector<32x64xf32>
    %cst_15 = arith.constant dense<0.000000e+00> : vector<32x64xf32>
    %18 = tpu.matmul %0, %17, %cst_15 {dimension_numbers = #tpu.dot_dimension_numbers<[1], [0], [0], [1], [0, 0, 1, 1], [], []>} : vector<32x32xf32>, vector<32x64xf32>, vector<32x64xf32> -> vector<32x64xf32>
    %cst_16 = arith.constant 1.000000e+00 : f32
    %19 = vector.broadcast %cst_16 : f32 to vector<32x64xf32>
    %20 = arith.mulf %19, %17 : vector<32x64xf32>
    %21 = arith.addf %20, %18 : vector<32x64xf32>
    %c0_17 = arith.constant 0 : index
    %c0_18 = arith.constant 0 : index
    %22 = vector.load %arg8[%c0_17, %c0_18] : memref<64x64xf32, #tpu.memory_space<vmem>>, vector<64x64xf32>
    %cst_19 = arith.constant dense<0.000000e+00> : vector<32x64xf32>
    %23 = tpu.matmul %21, %22, %cst_19 {dimension_numbers = #tpu.dot_dimension_numbers<[1], [0], [0], [1], [0, 0, 1, 1], [], []>} : vector<32x64xf32>, vector<64x64xf32>, vector<32x64xf32> -> vector<32x64xf32>
    %c0_20 = arith.constant 0 : index
    %c0_21 = arith.constant 0 : index
    %24 = vector.load %arg9[%c0_20, %c0_21] : memref<1x64xf32, #tpu.memory_space<vmem>>, vector<1x64xf32>
    %25 = vector.broadcast %24 : vector<1x64xf32> to vector<32x64xf32>
    %26 = arith.addf %23, %25 : vector<32x64xf32>
    %cst_22 = arith.constant 0.000000e+00 : f32
    %27 = vector.broadcast %cst_22 : f32 to vector<32x64xf32>
    %28 = arith.maximumf %26, %27 : vector<32x64xf32>
    %c0_23 = arith.constant 0 : index
    %c0_24 = arith.constant 0 : index
    %29 = vector.load %arg10[%c0_23, %c0_24] : memref<64x64xf32, #tpu.memory_space<vmem>>, vector<64x64xf32>
    %cst_25 = arith.constant dense<0.000000e+00> : vector<32x64xf32>
    %30 = tpu.matmul %28, %29, %cst_25 {dimension_numbers = #tpu.dot_dimension_numbers<[1], [0], [0], [1], [0, 0, 1, 1], [], []>} : vector<32x64xf32>, vector<64x64xf32>, vector<32x64xf32> -> vector<32x64xf32>
    %c0_26 = arith.constant 0 : index
    %c0_27 = arith.constant 0 : index
    %31 = vector.load %arg11[%c0_26, %c0_27] : memref<1x64xf32, #tpu.memory_space<vmem>>, vector<1x64xf32>
    %32 = vector.broadcast %31 : vector<1x64xf32> to vector<32x64xf32>
    %33 = arith.addf %30, %32 : vector<32x64xf32>
    %cst_28 = arith.constant dense<0.000000e+00> : vector<32x64xf32>
    %34 = tpu.matmul %0, %33, %cst_28 {dimension_numbers = #tpu.dot_dimension_numbers<[1], [0], [0], [1], [0, 0, 1, 1], [], []>} : vector<32x32xf32>, vector<32x64xf32>, vector<32x64xf32> -> vector<32x64xf32>
    %cst_29 = arith.constant 1.000000e+00 : f32
    %35 = vector.broadcast %cst_29 : f32 to vector<32x64xf32>
    %36 = arith.mulf %35, %33 : vector<32x64xf32>
    %37 = arith.addf %36, %34 : vector<32x64xf32>
    %c0_30 = arith.constant 0 : index
    %c0_31 = arith.constant 0 : index
    %38 = vector.load %arg12[%c0_30, %c0_31] : memref<64x64xf32, #tpu.memory_space<vmem>>, vector<64x64xf32>
    %cst_32 = arith.constant dense<0.000000e+00> : vector<32x64xf32>
    %39 = tpu.matmul %37, %38, %cst_32 {dimension_numbers = #tpu.dot_dimension_numbers<[1], [0], [0], [1], [0, 0, 1, 1], [], []>} : vector<32x64xf32>, vector<64x64xf32>, vector<32x64xf32> -> vector<32x64xf32>
    %c0_33 = arith.constant 0 : index
    %c0_34 = arith.constant 0 : index
    %40 = vector.load %arg13[%c0_33, %c0_34] : memref<1x64xf32, #tpu.memory_space<vmem>>, vector<1x64xf32>
    %41 = vector.broadcast %40 : vector<1x64xf32> to vector<32x64xf32>
    %42 = arith.addf %39, %41 : vector<32x64xf32>
    %cst_35 = arith.constant 0.000000e+00 : f32
    %43 = vector.broadcast %cst_35 : f32 to vector<32x64xf32>
    %44 = arith.maximumf %42, %43 : vector<32x64xf32>
    %c0_36 = arith.constant 0 : index
    %c0_37 = arith.constant 0 : index
    %45 = vector.load %arg14[%c0_36, %c0_37] : memref<64x64xf32, #tpu.memory_space<vmem>>, vector<64x64xf32>
    %cst_38 = arith.constant dense<0.000000e+00> : vector<32x64xf32>
    %46 = tpu.matmul %44, %45, %cst_38 {dimension_numbers = #tpu.dot_dimension_numbers<[1], [0], [0], [1], [0, 0, 1, 1], [], []>} : vector<32x64xf32>, vector<64x64xf32>, vector<32x64xf32> -> vector<32x64xf32>
    %c0_39 = arith.constant 0 : index
    %c0_40 = arith.constant 0 : index
    %47 = vector.load %arg15[%c0_39, %c0_40] : memref<1x64xf32, #tpu.memory_space<vmem>>, vector<1x64xf32>
    %48 = vector.broadcast %47 : vector<1x64xf32> to vector<32x64xf32>
    %49 = arith.addf %46, %48 : vector<32x64xf32>
    %c0_41 = arith.constant 0 : index
    %c0_42 = arith.constant 0 : index
    %50 = vector.load %arg3[%c0_41, %c0_42] : memref<8x32xf32, #tpu.memory_space<vmem>>, vector<8x32xf32>
    %cst_43 = arith.constant dense<0.000000e+00> : vector<8x64xf32>
    %51 = tpu.matmul %50, %17, %cst_43 {dimension_numbers = #tpu.dot_dimension_numbers<[1], [0], [0], [1], [0, 0, 1, 1], [], []>} : vector<8x32xf32>, vector<32x64xf32>, vector<8x64xf32> -> vector<8x64xf32>
    %cst_44 = arith.constant dense<0.000000e+00> : vector<8x64xf32>
    %52 = tpu.matmul %50, %33, %cst_44 {dimension_numbers = #tpu.dot_dimension_numbers<[1], [0], [0], [1], [0, 0, 1, 1], [], []>} : vector<8x32xf32>, vector<32x64xf32>, vector<8x64xf32> -> vector<8x64xf32>
    %cst_45 = arith.constant dense<0.000000e+00> : vector<8x64xf32>
    %53 = tpu.matmul %50, %49, %cst_45 {dimension_numbers = #tpu.dot_dimension_numbers<[1], [0], [0], [1], [0, 0, 1, 1], [], []>} : vector<8x32xf32>, vector<32x64xf32>, vector<8x64xf32> -> vector<8x64xf32>
    %c0_46 = arith.constant 0 : index
    %c0_47 = arith.constant 0 : index
    %54 = vector.load %arg16[%c0_46, %c0_47] : memref<64x128xf32, #tpu.memory_space<vmem>>, vector<64x128xf32>
    %cst_48 = arith.constant dense<0.000000e+00> : vector<8x128xf32>
    %55 = tpu.matmul %51, %54, %cst_48 {dimension_numbers = #tpu.dot_dimension_numbers<[1], [0], [0], [1], [0, 0, 1, 1], [], []>} : vector<8x64xf32>, vector<64x128xf32>, vector<8x128xf32> -> vector<8x128xf32>
    %c0_49 = arith.constant 0 : index
    %c0_50 = arith.constant 0 : index
    %56 = vector.load %arg17[%c0_49, %c0_50] : memref<64x128xf32, #tpu.memory_space<vmem>>, vector<64x128xf32>
    %cst_51 = arith.constant dense<0.000000e+00> : vector<8x128xf32>
    %57 = tpu.matmul %52, %56, %cst_51 {dimension_numbers = #tpu.dot_dimension_numbers<[1], [0], [0], [1], [0, 0, 1, 1], [], []>} : vector<8x64xf32>, vector<64x128xf32>, vector<8x128xf32> -> vector<8x128xf32>
    %58 = arith.addf %55, %57 : vector<8x128xf32>
    %c0_52 = arith.constant 0 : index
    %c0_53 = arith.constant 0 : index
    %59 = vector.load %arg18[%c0_52, %c0_53] : memref<64x128xf32, #tpu.memory_space<vmem>>, vector<64x128xf32>
    %cst_54 = arith.constant dense<0.000000e+00> : vector<8x128xf32>
    %60 = tpu.matmul %53, %59, %cst_54 {dimension_numbers = #tpu.dot_dimension_numbers<[1], [0], [0], [1], [0, 0, 1, 1], [], []>} : vector<8x64xf32>, vector<64x128xf32>, vector<8x128xf32> -> vector<8x128xf32>
    %61 = arith.addf %58, %60 : vector<8x128xf32>
    %c0_55 = arith.constant 0 : index
    %c0_56 = arith.constant 0 : index
    %62 = vector.load %arg19[%c0_55, %c0_56] : memref<1x128xf32, #tpu.memory_space<vmem>>, vector<1x128xf32>
    %63 = vector.broadcast %62 : vector<1x128xf32> to vector<8x128xf32>
    %64 = arith.addf %61, %63 : vector<8x128xf32>
    %cst_57 = arith.constant 0.000000e+00 : f32
    %65 = vector.broadcast %cst_57 : f32 to vector<8x128xf32>
    %66 = arith.maximumf %64, %65 : vector<8x128xf32>
    %c0_58 = arith.constant 0 : index
    %c0_59 = arith.constant 0 : index
    %67 = vector.load %arg20[%c0_58, %c0_59] : memref<128x128xf32, #tpu.memory_space<vmem>>, vector<128x128xf32>
    %cst_60 = arith.constant dense<0.000000e+00> : vector<8x128xf32>
    %68 = tpu.matmul %66, %67, %cst_60 {dimension_numbers = #tpu.dot_dimension_numbers<[1], [0], [0], [1], [0, 0, 1, 1], [], []>} : vector<8x128xf32>, vector<128x128xf32>, vector<8x128xf32> -> vector<8x128xf32>
    %c0_61 = arith.constant 0 : index
    %c0_62 = arith.constant 0 : index
    %69 = vector.load %arg21[%c0_61, %c0_62] : memref<1x128xf32, #tpu.memory_space<vmem>>, vector<1x128xf32>
    %70 = vector.broadcast %69 : vector<1x128xf32> to vector<8x128xf32>
    %71 = arith.addf %68, %70 : vector<8x128xf32>
    %c0_63 = arith.constant 0 : index
    %c0_64 = arith.constant 0 : index
    %72 = vector.load %arg22[%c0_63, %c0_64] : memref<8x128xf32, #tpu.memory_space<vmem>>, vector<8x128xf32>
    tpu.vector_store %arg22[%c0_63, %c0_64], %71 {strides = array<i32>} : memref<8x128xf32, #tpu.memory_space<vmem>>, vector<8x128xf32>,
    return
  }
  func.func @transform_0(%arg0: i32) -> (i32, i32) {
    %c0_i32 = arith.constant 0 : i32
    %c0_i32_0 = arith.constant 0 : i32
    %c0_i32_1 = arith.constant 0 : i32
    return %c0_i32, %c0_i32_0 : i32, i32
  }
  func.func @transform_1(%arg0: i32) -> (i32, i32) {
    %c0_i32 = arith.constant 0 : i32
    %c0_i32_0 = arith.constant 0 : i32
    %c0_i32_1 = arith.constant 0 : i32
    return %c0_i32, %c0_i32_0 : i32, i32
  }
  func.func @transform_2(%arg0: i32) -> (i32, i32) {
    %c0_i32 = arith.constant 0 : i32
    %c0_i32_0 = arith.constant 0 : i32
    %c0_i32_1 = arith.constant 0 : i32
    return %c0_i32, %c0_i32_0 : i32, i32
  }
  func.func @transform_3(%arg0: i32) -> (i32, i32) {
    %c0_i32 = arith.constant 0 : i32
    %c0_i32_0 = arith.constant 0 : i32
    %c0_i32_1 = arith.constant 0 : i32
    return %c0_i32, %c0_i32_0 : i32, i32
  }
  func.func @transform_4(%arg0: i32) -> (i32, i32) {
    %c0_i32 = arith.constant 0 : i32
    %c0_i32_0 = arith.constant 0 : i32
    %c0_i32_1 = arith.constant 0 : i32
    return %c0_i32, %c0_i32_0 : i32, i32
  }
  func.func @transform_5(%arg0: i32) -> (i32, i32) {
    %c0_i32 = arith.constant 0 : i32
    %c0_i32_0 = arith.constant 0 : i32
    %c0_i32_1 = arith.constant 0 : i32
    return %c0_i32, %c0_i32_0 : i32, i32
  }
  func.func @transform_6(%arg0: i32) -> (i32, i32) {
    %c0_i32 = arith.constant 0 : i32
    %c0_i32_0 = arith.constant 0 : i32
    %c0_i32_1 = arith.constant 0 : i32
    return %c0_i32, %c0_i32_0 : i32, i32
  }
  func.func @transform_7(%arg0: i32) -> (i32, i32) {
    %c0_i32 = arith.constant 0 : i32
    %c0_i32_0 = arith.constant 0 : i32
    %c0_i32_1 = arith.constant 0 : i32
    return %c0_i32, %c0_i32_0 : i32, i32
  }
  func.func @transform_8(%arg0: i32) -> (i32, i32) {
    %c0_i32 = arith.constant 0 : i32
    %c0_i32_0 = arith.constant 0 : i32
    %c0_i32_1 = arith.constant 0 : i32
    return %c0_i32, %c0_i32_0 : i32, i32
  }
  func.func @transform_9(%arg0: i32) -> (i32, i32) {
    %c0_i32 = arith.constant 0 : i32
    %c0_i32_0 = arith.constant 0 : i32
    %c0_i32_1 = arith.constant 0 : i32
    return %c0_i32, %c0_i32_0 : i32, i32
  }
  func.func @transform_10(%arg0: i32) -> (i32, i32) {
    %c0_i32 = arith.constant 0 : i32
    %c0_i32_0 = arith.constant 0 : i32
    %c0_i32_1 = arith.constant 0 : i32
    return %c0_i32, %c0_i32_0 : i32, i32
  }
  func.func @transform_11(%arg0: i32) -> (i32, i32) {
    %c0_i32 = arith.constant 0 : i32
    %c0_i32_0 = arith.constant 0 : i32
    %c0_i32_1 = arith.constant 0 : i32
    return %c0_i32, %c0_i32_0 : i32, i32
  }
  func.func @transform_12(%arg0: i32) -> (i32, i32) {
    %c0_i32 = arith.constant 0 : i32
    %c0_i32_0 = arith.constant 0 : i32
    %c0_i32_1 = arith.constant 0 : i32
    return %c0_i32, %c0_i32_0 : i32, i32
  }
  func.func @transform_13(%arg0: i32) -> (i32, i32) {
    %c0_i32 = arith.constant 0 : i32
    %c0_i32_0 = arith.constant 0 : i32
    %c0_i32_1 = arith.constant 0 : i32
    return %c0_i32, %c0_i32_0 : i32, i32
  }
  func.func @transform_14(%arg0: i32) -> (i32, i32) {
    %c0_i32 = arith.constant 0 : i32
    %c0_i32_0 = arith.constant 0 : i32
    %c0_i32_1 = arith.constant 0 : i32
    return %c0_i32, %c0_i32_0 : i32, i32
  }
  func.func @transform_15(%arg0: i32) -> (i32, i32) {
    %c0_i32 = arith.constant 0 : i32
    %c0_i32_0 = arith.constant 0 : i32
    %c0_i32_1 = arith.constant 0 : i32
    return %c0_i32, %c0_i32_0 : i32, i32
  }
  func.func @transform_16(%arg0: i32) -> (i32, i32) {
    %c0_i32 = arith.constant 0 : i32
    %c0_i32_0 = arith.constant 0 : i32
    %c0_i32_1 = arith.constant 0 : i32
    return %c0_i32, %c0_i32_0 : i32, i32
  }
  func.func @transform_17(%arg0: i32) -> (i32, i32) {
    %c0_i32 = arith.constant 0 : i32
    %c0_i32_0 = arith.constant 0 : i32
    %c0_i32_1 = arith.constant 0 : i32
    return %c0_i32, %c0_i32_0 : i32, i32
  }
  func.func @transform_18(%arg0: i32) -> (i32, i32) {
    %c0_i32 = arith.constant 0 : i32
    %c0_i32_0 = arith.constant 0 : i32
    %c0_i32_1 = arith.constant 0 : i32
    return %c0_i32, %c0_i32_0 : i32, i32
  }
  func.func @transform_19(%arg0: i32) -> (i32, i32) {
    %c0_i32 = arith.constant 0 : i32
    %c0_i32_0 = arith.constant 0 : i32
    %c0_i32_1 = arith.constant 0 : i32
    return %c0_i32, %c0_i32_0 : i32, i32
  }
  func.func @transform_20(%arg0: i32) -> (i32, i32) {
    %c0_i32 = arith.constant 0 : i32
    %c0_i32_0 = arith.constant 0 : i32
    %c0_i32_1 = arith.constant 0 : i32
    return %c0_i32, %c0_i32_0 : i32, i32
  }
  func.func @transform_21(%arg0: i32) -> (i32, i32) {
    %c0_i32 = arith.constant 0 : i32
    %c0_i32_0 = arith.constant 0 : i32
    %c0_i32_1 = arith.constant 0 : i32
    return %c0_i32, %c0_i32_0 : i32, i32
  }
}

</mosaic_0001>

<llo_original>
// kernel: gin_forward.1
$region0: #{gin_forward.1}
  #allocation0 [shape = 'u32[]', space=smem, size = 0x4, offset = 0x4, fixed_abs, tag = 'smem constant byte address 0x4 - core index']
  #allocation1 [shape = 'u32[144,128]{1,0:T(1,128)}', space=vmem, size = 0x12000, scoped, tag = 'internal scratch']
  %s0 = inlined_call_operand.vmem [shape: f32[32,128], index: 0, kind: input, shape index: {}]
  %s1 = inlined_call_operand.vmem [shape: f32[32,32], index: 1, kind: input, shape index: {}]
  %s2 = inlined_call_operand.vmem [shape: f32[8,32], index: 2, kind: input, shape index: {}]
  %s3 = inlined_call_operand.vmem [shape: f32[128,64], index: 3, kind: input, shape index: {}]
  %s4 = inlined_call_operand.vmem [shape: f32[1,64], index: 4, kind: input, shape index: {}]
  %s5 = inlined_call_operand.vmem [shape: f32[64,64], index: 5, kind: input, shape index: {}]
  %s6 = inlined_call_operand.vmem [shape: f32[1,64], index: 6, kind: input, shape index: {}]
  %s7 = inlined_call_operand.vmem [shape: f32[64,64], index: 7, kind: input, shape index: {}]
  %s8 = inlined_call_operand.vmem [shape: f32[1,64], index: 8, kind: input, shape index: {}]
  %s9 = inlined_call_operand.vmem [shape: f32[64,64], index: 9, kind: input, shape index: {}]
  %s10 = inlined_call_operand.vmem [shape: f32[1,64], index: 10, kind: input, shape index: {}]
  %s11 = inlined_call_operand.vmem [shape: f32[64,64], index: 11, kind: input, shape index: {}]
  %s12 = inlined_call_operand.vmem [shape: f32[1,64], index: 12, kind: input, shape index: {}]
  %s13 = inlined_call_operand.vmem [shape: f32[64,64], index: 13, kind: input, shape index: {}]
  %s14 = inlined_call_operand.vmem [shape: f32[1,64], index: 14, kind: input, shape index: {}]
  %s15 = inlined_call_operand.vmem [shape: f32[64,128], index: 15, kind: input, shape index: {}]
  %s16 = inlined_call_operand.vmem [shape: f32[64,128], index: 16, kind: input, shape index: {}]
  %s17 = inlined_call_operand.vmem [shape: f32[64,128], index: 17, kind: input, shape index: {}]
  %s18 = inlined_call_operand.vmem [shape: f32[1,128], index: 18, kind: input, shape index: {}]
  %s19 = inlined_call_operand.vmem [shape: f32[128,128], index: 19, kind: input, shape index: {}]
  %s20 = inlined_call_operand.vmem [shape: f32[1,128], index: 20, kind: input, shape index: {}]
  %s21 = inlined_call_operand.vmem [shape: f32[8,128], index: 21, kind: output, shape index: {}]
  %s22 = sld [smem:[#allocation0]]
  $region94: #{gin_forward.1} parent=0
    _
  %s24 = ssub.s32 1, %s22
  %s25 = scalar_select 0, %s24, %s22
  // Predicated region
  $region2: #{gin_forward.1} parent=0 // pred_check
    _
  $region3: #{gin_forward.1} parent=0 // pred_check_branch
    %27 = sbr.rel (0) target = $region5
  $region4: #{gin_forward.1} parent=0 // pred_region
    _
  $region5: #{gin_forward.1} parent=0 // pred_fallthru
    _
  // Predicated region
  $region6: #{gin_forward.1} parent=0 // pred_check
    _
  $region7: #{gin_forward.1} parent=0 // pred_check_branch
    %29 = sbr.rel (0) target = $region9
  $region8: #{gin_forward.1} parent=0 // pred_region
    _
  $region9: #{gin_forward.1} parent=0 // pred_fallthru
    _
  // Predicated region
  $region10: #{gin_forward.1} parent=0 // pred_check
    _
  $region11: #{gin_forward.1} parent=0 // pred_check_branch
    %31 = sbr.rel (0) target = $region13
  $region12: #{gin_forward.1} parent=0 // pred_region
    _
  $region13: #{gin_forward.1} parent=0 // pred_fallthru
    _
  // Predicated region
  $region14: #{gin_forward.1} parent=0 // pred_check
    _
  $region15: #{gin_forward.1} parent=0 // pred_check_branch
    %33 = sbr.rel (0) target = $region17
  $region16: #{gin_forward.1} parent=0 // pred_region
    _
  $region17: #{gin_forward.1} parent=0 // pred_fallthru
    _
  // Predicated region
  $region18: #{gin_forward.1} parent=0 // pred_check
    _
  $region19: #{gin_forward.1} parent=0 // pred_check_branch
    %35 = sbr.rel (0) target = $region21
  $region20: #{gin_forward.1} parent=0 // pred_region
    _
  $region21: #{gin_forward.1} parent=0 // pred_fallthru
    _
  // Predicated region
  $region22: #{gin_forward.1} parent=0 // pred_check
    _
  $region23: #{gin_forward.1} parent=0 // pred_check_branch
    %37 = sbr.rel (0) target = $region25
  $region24: #{gin_forward.1} parent=0 // pred_region
    _
  $region25: #{gin_forward.1} parent=0 // pred_fallthru
    _
  // Predicated region
  $region26: #{gin_forward.1} parent=0 // pred_check
    _
  $region27: #{gin_forward.1} parent=0 // pred_check_branch
    %39 = sbr.rel (0) target = $region29
  $region28: #{gin_forward.1} parent=0 // pred_region
    _
  $region29: #{gin_forward.1} parent=0 // pred_fallthru
    _
  // Predicated region
  $region30: #{gin_forward.1} parent=0 // pred_check
    _
  $region31: #{gin_forward.1} parent=0 // pred_check_branch
    %41 = sbr.rel (0) target = $region33
  $region32: #{gin_forward.1} parent=0 // pred_region
    _
  $region33: #{gin_forward.1} parent=0 // pred_fallthru
    _
  // Predicated region
  $region34: #{gin_forward.1} parent=0 // pred_check
    _
  $region35: #{gin_forward.1} parent=0 // pred_check_branch
    %43 = sbr.rel (0) target = $region37
  $region36: #{gin_forward.1} parent=0 // pred_region
    _
  $region37: #{gin_forward.1} parent=0 // pred_fallthru
    _
  // Predicated region
  $region38: #{gin_forward.1} parent=0 // pred_check
    _
  $region39: #{gin_forward.1} parent=0 // pred_check_branch
    %45 = sbr.rel (0) target = $region41
  $region40: #{gin_forward.1} parent=0 // pred_region
    _
  $region41: #{gin_forward.1} parent=0 // pred_fallthru
    _
  // Predicated region
  $region42: #{gin_forward.1} parent=0 // pred_check
    _
  $region43: #{gin_forward.1} parent=0 // pred_check_branch
    %47 = sbr.rel (0) target = $region45
  $region44: #{gin_forward.1} parent=0 // pred_region
    _
  $region45: #{gin_forward.1} parent=0 // pred_fallthru
    _
  // Predicated region
  $region46: #{gin_forward.1} parent=0 // pred_check
    _
  $region47: #{gin_forward.1} parent=0 // pred_check_branch
    %49 = sbr.rel (0) target = $region49
  $region48: #{gin_forward.1} parent=0 // pred_region
    _
  $region49: #{gin_forward.1} parent=0 // pred_fallthru
    _
  // Predicated region
  $region50: #{gin_forward.1} parent=0 // pred_check
    _
  $region51: #{gin_forward.1} parent=0 // pred_check_branch
    %51 = sbr.rel (0) target = $region53
  $region52: #{gin_forward.1} parent=0 // pred_region
    _
  $region53: #{gin_forward.1} parent=0 // pred_fallthru
    _
  // Predicated region
  $region54: #{gin_forward.1} parent=0 // pred_check
    _
  $region55: #{gin_forward.1} parent=0 // pred_check_branch
    %53 = sbr.rel (0) target = $region57
  $region56: #{gin_forward.1} parent=0 // pred_region
    _
  $region57: #{gin_forward.1} parent=0 // pred_fallthru
    _
  // Predicated region
  $region58: #{gin_forward.1} parent=0 // pred_check
    _
  $region59: #{gin_forward.1} parent=0 // pred_check_branch
    %55 = sbr.rel (0) target = $region61
  $region60: #{gin_forward.1} parent=0 // pred_region
    _
  $region61: #{gin_forward.1} parent=0 // pred_fallthru
    _
  // Predicated region
  $region62: #{gin_forward.1} parent=0 // pred_check
    _
  $region63: #{gin_forward.1} parent=0 // pred_check_branch
    %57 = sbr.rel (0) target = $region65
  $region64: #{gin_forward.1} parent=0 // pred_region
    _
  $region65: #{gin_forward.1} parent=0 // pred_fallthru
    _
  // Predicated region
  $region66: #{gin_forward.1} parent=0 // pred_check
    _
  $region67: #{gin_forward.1} parent=0 // pred_check_branch
    %59 = sbr.rel (0) target = $region69
  $region68: #{gin_forward.1} parent=0 // pred_region
    _
  $region69: #{gin_forward.1} parent=0 // pred_fallthru
    _
  // Predicated region
  $region70: #{gin_forward.1} parent=0 // pred_check
    _
  $region71: #{gin_forward.1} parent=0 // pred_check_branch
    %61 = sbr.rel (0) target = $region73
  $region72: #{gin_forward.1} parent=0 // pred_region
    _
  $region73: #{gin_forward.1} parent=0 // pred_fallthru
    _
  // Predicated region
  $region74: #{gin_forward.1} parent=0 // pred_check
    _
  $region75: #{gin_forward.1} parent=0 // pred_check_branch
    %63 = sbr.rel (0) target = $region77
  $region76: #{gin_forward.1} parent=0 // pred_region
    _
  $region77: #{gin_forward.1} parent=0 // pred_fallthru
    _
  // Predicated region
  $region78: #{gin_forward.1} parent=0 // pred_check
    _
  $region79: #{gin_forward.1} parent=0 // pred_check_branch
    %65 = sbr.rel (0) target = $region81
  $region80: #{gin_forward.1} parent=0 // pred_region
    _
  $region81: #{gin_forward.1} parent=0 // pred_fallthru
    _
  // Predicated region
  $region82: #{gin_forward.1} parent=0 // pred_check
    _
  $region83: #{gin_forward.1} parent=0 // pred_check_branch
    %67 = sbr.rel (0) target = $region85
  $region84: #{gin_forward.1} parent=0 // pred_region
    _
  $region85: #{gin_forward.1} parent=0 // pred_fallthru
    _
  %v68 = vld [vmem:[%s1] sm:$0xff]
  %v69 = vld [vmem:[%s1 + $0x8] sm:$0xff]
  %v70 = vld [vmem:[%s1 + $0x10] sm:$0xff]
  %v71 = vld [vmem:[%s1 + $0x18] sm:$0xff]
  %v72 = vld [vmem:[%s0] sm:$0xff]
  %v73 = vld [vmem:[%s0 + $0x8] sm:$0xff]
  %v74 = vld [vmem:[%s0 + $0x10] sm:$0xff]
  %v75 = vld [vmem:[%s0 + $0x18] sm:$0xff]
  %vm76 = vcmask 261120
  %v78 = vsel %vm76, %v68, 0
  %v81 = vsel %vm76, %v69, 0
  %v84 = vsel %vm76, %v70, 0
  %v87 = vsel %vm76, %v71, 0
  %89 = vmatprep.subr.mxu0 0.0
  %90 = vmatpush1.msra.mxu0 0.0
  %91 = vmatprep.subr.mxu0 0.0
  %92 = vmatpush1.msra.mxu0 0.0
  %93 = vmatprep.subr.mxu0 0.0
  %94 = vmatpush1.msra.mxu0 0.0
  %95 = vmatprep.subr.mxu0 0.0
  %96 = vmatpush1.msra.mxu0 0.0
  %97 = vmatprep.subr.mxu0 0.0
  %98 = vmatpush1.msra.mxu0 0.0
  %99 = vmatprep.subr.mxu0 0.0
  %100 = vmatpush1.msra.mxu0 0.0
  %101 = vmatprep.subr.mxu0 0.0
  %102 = vmatpush1.msra.mxu0 0.0
  %103 = vmatprep.subr.mxu0 0.0
  %104 = vmatpush1.msra.mxu0 0.0
  %105 = vmatprep.subr.mxu0 0.0
  %106 = vmatpush1.msra.mxu0 0.0
  %107 = vmatprep.subr.mxu0 0.0
  %108 = vmatpush1.msra.mxu0 0.0
  %109 = vmatprep.subr.mxu0 0.0
  %110 = vmatpush1.msra.mxu0 0.0
  %111 = vmatprep.subr.mxu0 0.0
  %112 = vmatpush1.msra.mxu0 0.0
  %113 = vmatprep.subr.mxu0 0.0
  %114 = vmatpush1.msra.mxu0 %v75
  %115 = vmatprep.subr.mxu0 0.0
  %116 = vmatpush1.msra.mxu0 %v74
  %117 = vmatprep.subr.mxu0 0.0
  %118 = vmatpush1.msra.mxu0 %v73
  %119 = vmatprep.subr.mxu0 0.0
  %120 = vmatpush1.msra.mxu0 %v72
  %121 = vmatprep.subr.mxu0 0.0
  %122 = vmatpush2.msra.mxu0 0.0
  %123 = vmatprep.subr.mxu0 0.0
  %124 = vmatpush2.msra.mxu0 0.0
  %125 = vmatprep.subr.mxu0 0.0
  %126 = vmatpush2.msra.mxu0 0.0
  %127 = vmatprep.subr.mxu0 0.0
  %128 = vmatpush2.msra.mxu0 0.0
  %129 = vmatprep.subr.mxu0 0.0
  %130 = vmatpush2.msra.mxu0 0.0
  %131 = vmatprep.subr.mxu0 0.0
  %132 = vmatpush2.msra.mxu0 0.0
  %133 = vmatprep.subr.mxu0 0.0
  %134 = vmatpush2.msra.mxu0 0.0
  %135 = vmatprep.subr.mxu0 0.0
  %136 = vmatpush2.msra.mxu0 0.0
  %137 = vmatprep.subr.mxu0 0.0
  %138 = vmatpush2.msra.mxu0 0.0
  %139 = vmatprep.subr.mxu0 0.0
  %140 = vmatpush2.msra.mxu0 0.0
  %141 = vmatprep.subr.mxu0 0.0
  %142 = vmatpush2.msra.mxu0 0.0
  %143 = vmatprep.subr.mxu0 0.0
  %144 = vmatpush2.msra.mxu0 0.0
  %145 = vmatprep.subr.mxu0 0.0
  %146 = vmatpush2.msra.mxu0 0.0
  %147 = vmatprep.subr.mxu0 0.0
  %148 = vmatpush2.msra.mxu0 0.0
  %149 = vmatprep.subr.mxu0 0.0
  %150 = vmatpush2.msra.mxu0 0.0
  %151 = vmatprep.subr.mxu0 0.0
  %152 = vmatpush2.msra.mxu0 0.0
  %153 = vmatprep.mubr.f32.mxu0 0.0
  %154 = vmatmul.mubr.f32.gmra.mxu0 %v78
  %v155 = vpop.f32.mrf.mxu0
  %v156 = vadd.f32 0.0, %v155
  %v157 = vpop.f32.mrf.mxu0
  %158 = vmatprep.mubr.f32.mxu0 0.0
  %159 = vmatmul.mubr.f32.gmra.mxu0 %v81
  %v160 = vpop.f32.mrf.mxu0
  %v161 = vadd.f32 0.0, %v160
  %v162 = vpop.f32.mrf.mxu0
  %163 = vmatprep.mubr.f32.mxu0 0.0
  %164 = vmatmul.mubr.f32.gmra.mxu0 %v84
  %v165 = vpop.f32.mrf.mxu0
  %v166 = vadd.f32 0.0, %v165
  %v167 = vpop.f32.mrf.mxu0
  %168 = vmatprep.mubr.f32.mxu0 0.0
  %169 = vmatmul.mubr.f32.gmra.mxu0 %v87
  %v170 = vpop.f32.mrf.mxu0
  %v171 = vadd.f32 0.0, %v170
  %v172 = vpop.f32.mrf.mxu0
  %173 = vdwg.mxu0
  %v174 = vadd.f32 %v72, %v156
  %v175 = vadd.f32 %v73, %v161
  %v176 = vadd.f32 %v74, %v166
  %v177 = vadd.f32 %v75, %v171
  %v178 = vld [vmem:[%s3] sm:$0xff]
  %v179 = vld [vmem:[%s3 + $0x8] sm:$0xff]
  %v180 = vld [vmem:[%s3 + $0x10] sm:$0xff]
  %v181 = vld [vmem:[%s3 + $0x18] sm:$0xff]
  %v182 = vld [vmem:[%s3 + $0x20] sm:$0xff]
  %v183 = vld [vmem:[%s3 + $0x28] sm:$0xff]
  %v184 = vld [vmem:[%s3 + $0x30] sm:$0xff]
  %v185 = vld [vmem:[%s3 + $0x38] sm:$0xff]
  %v186 = vld [vmem:[%s3 + $0x40] sm:$0xff]
  %v187 = vld [vmem:[%s3 + $0x48] sm:$0xff]
  %v188 = vld [vmem:[%s3 + $0x50] sm:$0xff]
  %v189 = vld [vmem:[%s3 + $0x58] sm:$0xff]
  %v190 = vld [vmem:[%s3 + $0x60] sm:$0xff]
  %v191 = vld [vmem:[%s3 + $0x68] sm:$0xff]
  %v192 = vld [vmem:[%s3 + $0x70] sm:$0xff]
  %v193 = vld [vmem:[%s3 + $0x78] sm:$0xff]
  %v194 = vld [vmem:[%s4] sm:$0x1]
  %v196 = vlaneseq
  %v197 = vshrl.u32 %v196, 7
  %v198 = vsub.s32 0, %v197
  %v199 = vrot.slane %v194, %v198
  %201 = vmatprep.subr.mxu0 0.0
  %202 = vmatpush1.msra.mxu0 %v193
  %203 = vmatprep.subr.mxu0 0.0
  %204 = vmatpush1.msra.mxu0 %v192
  %205 = vmatprep.subr.mxu0 0.0
  %206 = vmatpush1.msra.mxu0 %v191
  %207 = vmatprep.subr.mxu0 0.0
  %208 = vmatpush1.msra.mxu0 %v190
  %209 = vmatprep.subr.mxu0 0.0
  %210 = vmatpush1.msra.mxu0 %v189
  %211 = vmatprep.subr.mxu0 0.0
  %212 = vmatpush1.msra.mxu0 %v188
  %213 = vmatprep.subr.mxu0 0.0
  %214 = vmatpush1.msra.mxu0 %v187
  %215 = vmatprep.subr.mxu0 0.0
  %216 = vmatpush1.msra.mxu0 %v186
  %217 = vmatprep.subr.mxu0 0.0
  %218 = vmatpush1.msra.mxu0 %v185
  %219 = vmatprep.subr.mxu0 0.0
  %220 = vmatpush1.msra.mxu0 %v184
  %221 = vmatprep.subr.mxu0 0.0
  %222 = vmatpush1.msra.mxu0 %v183
  %223 = vmatprep.subr.mxu0 0.0
  %224 = vmatpush1.msra.mxu0 %v182
  %225 = vmatprep.subr.mxu0 0.0
  %226 = vmatpush1.msra.mxu0 %v181
  %227 = vmatprep.subr.mxu0 0.0
  %228 = vmatpush1.msra.mxu0 %v180
  %229 = vmatprep.subr.mxu0 0.0
  %230 = vmatpush1.msra.mxu0 %v179
  %231 = vmatprep.subr.mxu0 0.0
  %232 = vmatpush1.msra.mxu0 %v178
  %233 = vmatprep.subr.mxu0 0.0
  %234 = vmatpush2.msra.mxu0 0.0
  %235 = vmatprep.subr.mxu0 0.0
  %236 = vmatpush2.msra.mxu0 0.0
  %237 = vmatprep.subr.mxu0 0.0
  %238 = vmatpush2.msra.mxu0 0.0
  %239 = vmatprep.subr.mxu0 0.0
  %240 = vmatpush2.msra.mxu0 0.0
  %241 = vmatprep.subr.mxu0 0.0
  %242 = vmatpush2.msra.mxu0 0.0
  %243 = vmatprep.subr.mxu0 0.0
  %244 = vmatpush2.msra.mxu0 0.0
  %245 = vmatprep.subr.mxu0 0.0
  %246 = vmatpush2.msra.mxu0 0.0
  %247 = vmatprep.subr.mxu0 0.0
  %248 = vmatpush2.msra.mxu0 0.0
  %249 = vmatprep.subr.mxu0 0.0
  %250 = vmatpush2.msra.mxu0 0.0
  %251 = vmatprep.subr.mxu0 0.0
  %252 = vmatpush2.msra.mxu0 0.0
  %253 = vmatprep.subr.mxu0 0.0
  %254 = vmatpush2.msra.mxu0 0.0
  %255 = vmatprep.subr.mxu0 0.0
  %256 = vmatpush2.msra.mxu0 0.0
  %257 = vmatprep.subr.mxu0 0.0
  %258 = vmatpush2.msra.mxu0 0.0
  %259 = vmatprep.subr.mxu0 0.0
  %260 = vmatpush2.msra.mxu0 0.0
  %261 = vmatprep.subr.mxu0 0.0
  %262 = vmatpush2.msra.mxu0 0.0
  %263 = vmatprep.subr.mxu0 0.0
  %264 = vmatpush2.msra.mxu0 0.0
  %265 = vmatprep.mubr.f32.mxu0 0.0
  %266 = vmatmul.mubr.f32.gmra.mxu0 %v174
  %v267 = vpop.f32.mrf.mxu0
  %v268 = vadd.f32 %v199, %v267
  %v269 = vpop.f32.mrf.mxu0
  %270 = vmatprep.mubr.f32.mxu0 0.0
  %271 = vmatmul.mubr.f32.gmra.mxu0 %v175
  %v272 = vpop.f32.mrf.mxu0
  %v273 = vadd.f32 %v199, %v272
  %v274 = vpop.f32.mrf.mxu0
  %275 = vmatprep.mubr.f32.mxu0 0.0
  %276 = vmatmul.mubr.f32.gmra.mxu0 %v176
  %v277 = vpop.f32.mrf.mxu0
  %v278 = vadd.f32 %v199, %v277
  %v279 = vpop.f32.mrf.mxu0
  %280 = vmatprep.mubr.f32.mxu0 0.0
  %281 = vmatmul.mubr.f32.gmra.mxu0 %v177
  %v282 = vpop.f32.mrf.mxu0
  %v283 = vadd.f32 %v199, %v282
  %v284 = vpop.f32.mrf.mxu0
  %285 = vdwg.mxu0
  %v286 = vmax.f32 %v268, 0.0
  %v287 = vmax.f32 %v273, 0.0
  %v288 = vmax.f32 %v278, 0.0
  %v289 = vmax.f32 %v283, 0.0
  %v290 = vld [vmem:[%s5] sm:$0xff]
  %v291 = vld [vmem:[%s5 + $0x8] sm:$0xff]
  %v292 = vld [vmem:[%s5 + $0x10] sm:$0xff]
  %v293 = vld [vmem:[%s5 + $0x18] sm:$0xff]
  %v294 = vld [vmem:[%s5 + $0x20] sm:$0xff]
  %v295 = vld [vmem:[%s5 + $0x28] sm:$0xff]
  %v296 = vld [vmem:[%s5 + $0x30] sm:$0xff]
  %v297 = vld [vmem:[%s5 + $0x38] sm:$0xff]
  %v298 = vld [vmem:[%s6] sm:$0x1]
  %v300 = vlaneseq
  %v301 = vshrl.u32 %v300, 7
  %v302 = vsub.s32 0, %v301
  %v303 = vrot.slane %v298, %v302
  %vm305 = vcmask 523264
  %v307 = vsel %vm305, %v286, 0
  %v310 = vsel %vm305, %v287, 0
  %v313 = vsel %vm305, %v288, 0
  %v316 = vsel %vm305, %v289, 0
  %318 = vmatprep.subr.mxu0 0.0
  %319 = vmatpush1.msra.mxu0 0.0
  %320 = vmatprep.subr.mxu0 0.0
  %321 = vmatpush1.msra.mxu0 0.0
  %322 = vmatprep.subr.mxu0 0.0
  %323 = vmatpush1.msra.mxu0 0.0
  %324 = vmatprep.subr.mxu0 0.0
  %325 = vmatpush1.msra.mxu0 0.0
  %326 = vmatprep.subr.mxu0 0.0
  %327 = vmatpush1.msra.mxu0 0.0
  %328 = vmatprep.subr.mxu0 0.0
  %329 = vmatpush1.msra.mxu0 0.0
  %330 = vmatprep.subr.mxu0 0.0
  %331 = vmatpush1.msra.mxu0 0.0
  %332 = vmatprep.subr.mxu0 0.0
  %333 = vmatpush1.msra.mxu0 0.0
  %334 = vmatprep.subr.mxu0 0.0
  %335 = vmatpush1.msra.mxu0 %v297
  %336 = vmatprep.subr.mxu0 0.0
  %337 = vmatpush1.msra.mxu0 %v296
  %338 = vmatprep.subr.mxu0 0.0
  %339 = vmatpush1.msra.mxu0 %v295
  %340 = vmatprep.subr.mxu0 0.0
  %341 = vmatpush1.msra.mxu0 %v294
  %342 = vmatprep.subr.mxu0 0.0
  %343 = vmatpush1.msra.mxu0 %v293
  %344 = vmatprep.subr.mxu0 0.0
  %345 = vmatpush1.msra.mxu0 %v292
  %346 = vmatprep.subr.mxu0 0.0
  %347 = vmatpush1.msra.mxu0 %v291
  %348 = vmatprep.subr.mxu0 0.0
  %349 = vmatpush1.msra.mxu0 %v290
  %350 = vmatprep.subr.mxu0 0.0
  %351 = vmatpush2.msra.mxu0 0.0
  %352 = vmatprep.subr.mxu0 0.0
  %353 = vmatpush2.msra.mxu0 0.0
  %354 = vmatprep.subr.mxu0 0.0
  %355 = vmatpush2.msra.mxu0 0.0
  %356 = vmatprep.subr.mxu0 0.0
  %357 = vmatpush2.msra.mxu0 0.0
  %358 = vmatprep.subr.mxu0 0.0
  %359 = vmatpush2.msra.mxu0 0.0
  %360 = vmatprep.subr.mxu0 0.0
  %361 = vmatpush2.msra.mxu0 0.0
  %362 = vmatprep.subr.mxu0 0.0
  %363 = vmatpush2.msra.mxu0 0.0
  %364 = vmatprep.subr.mxu0 0.0
  %365 = vmatpush2.msra.mxu0 0.0
  %366 = vmatprep.subr.mxu0 0.0
  %367 = vmatpush2.msra.mxu0 0.0
  %368 = vmatprep.subr.mxu0 0.0
  %369 = vmatpush2.msra.mxu0 0.0
  %370 = vmatprep.subr.mxu0 0.0
  %371 = vmatpush2.msra.mxu0 0.0
  %372 = vmatprep.subr.mxu0 0.0
  %373 = vmatpush2.msra.mxu0 0.0
  %374 = vmatprep.subr.mxu0 0.0
  %375 = vmatpush2.msra.mxu0 0.0
  %376 = vmatprep.subr.mxu0 0.0
  %377 = vmatpush2.msra.mxu0 0.0
  %378 = vmatprep.subr.mxu0 0.0
  %379 = vmatpush2.msra.mxu0 0.0
  %380 = vmatprep.subr.mxu0 0.0
  %381 = vmatpush2.msra.mxu0 0.0
  %382 = vmatprep.mubr.f32.mxu0 0.0
  %383 = vmatmul.mubr.f32.gmra.mxu0 %v307
  %v384 = vpop.f32.mrf.mxu0
  %v385 = vadd.f32 %v303, %v384
  %v386 = vpop.f32.mrf.mxu0
  %387 = vmatprep.mubr.f32.mxu0 0.0
  %388 = vmatmul.mubr.f32.gmra.mxu0 %v310
  %v389 = vpop.f32.mrf.mxu0
  %v390 = vadd.f32 %v303, %v389
  %v391 = vpop.f32.mrf.mxu0
  %392 = vmatprep.mubr.f32.mxu0 0.0
  %393 = vmatmul.mubr.f32.gmra.mxu0 %v313
  %v394 = vpop.f32.mrf.mxu0
  %v395 = vadd.f32 %v303, %v394
  %v396 = vpop.f32.mrf.mxu0
  %397 = vmatprep.mubr.f32.mxu0 0.0
  %398 = vmatmul.mubr.f32.gmra.mxu0 %v316
  %v399 = vpop.f32.mrf.mxu0
  %v400 = vadd.f32 %v303, %v399
  %v401 = vpop.f32.mrf.mxu0
  %402 = vdwg.mxu0
  %403 = vmatprep.subr.mxu0 0.0
  %404 = vmatpush1.msra.mxu0 0.0
  %405 = vmatprep.subr.mxu0 0.0
  %406 = vmatpush1.msra.mxu0 0.0
  %407 = vmatprep.subr.mxu0 0.0
  %408 = vmatpush1.msra.mxu0 0.0
  %409 = vmatprep.subr.mxu0 0.0
  %410 = vmatpush1.msra.mxu0 0.0
  %411 = vmatprep.subr.mxu0 0.0
  %412 = vmatpush1.msra.mxu0 0.0
  %413 = vmatprep.subr.mxu0 0.0
  %414 = vmatpush1.msra.mxu0 0.0
  %415 = vmatprep.subr.mxu0 0.0
  %416 = vmatpush1.msra.mxu0 0.0
  %417 = vmatprep.subr.mxu0 0.0
  %418 = vmatpush1.msra.mxu0 0.0
  %419 = vmatprep.subr.mxu0 0.0
  %420 = vmatpush1.msra.mxu0 0.0
  %421 = vmatprep.subr.mxu0 0.0
  %422 = vmatpush1.msra.mxu0 0.0
  %423 = vmatprep.subr.mxu0 0.0
  %424 = vmatpush1.msra.mxu0 0.0
  %425 = vmatprep.subr.mxu0 0.0
  %426 = vmatpush1.msra.mxu0 0.0
  %427 = vmatprep.subr.mxu0 0.0
  %428 = vmatpush1.msra.mxu0 %v400
  %429 = vmatprep.subr.mxu0 0.0
  %430 = vmatpush1.msra.mxu0 %v395
  %431 = vmatprep.subr.mxu0 0.0
  %432 = vmatpush1.msra.mxu0 %v390
  %433 = vmatprep.subr.mxu0 0.0
  %434 = vmatpush1.msra.mxu0 %v385
  %435 = vmatprep.subr.mxu0 0.0
  %436 = vmatpush2.msra.mxu0 0.0
  %437 = vmatprep.subr.mxu0 0.0
  %438 = vmatpush2.msra.mxu0 0.0
  %439 = vmatprep.subr.mxu0 0.0
  %440 = vmatpush2.msra.mxu0 0.0
  %441 = vmatprep.subr.mxu0 0.0
  %442 = vmatpush2.msra.mxu0 0.0
  %443 = vmatprep.subr.mxu0 0.0
  %444 = vmatpush2.msra.mxu0 0.0
  %445 = vmatprep.subr.mxu0 0.0
  %446 = vmatpush2.msra.mxu0 0.0
  %447 = vmatprep.subr.mxu0 0.0
  %448 = vmatpush2.msra.mxu0 0.0
  %449 = vmatprep.subr.mxu0 0.0
  %450 = vmatpush2.msra.mxu0 0.0
  %451 = vmatprep.subr.mxu0 0.0
  %452 = vmatpush2.msra.mxu0 0.0
  %453 = vmatprep.subr.mxu0 0.0
  %454 = vmatpush2.msra.mxu0 0.0
  %455 = vmatprep.subr.mxu0 0.0
  %456 = vmatpush2.msra.mxu0 0.0
  %457 = vmatprep.subr.mxu0 0.0
  %458 = vmatpush2.msra.mxu0 0.0
  %459 = vmatprep.subr.mxu0 0.0
  %460 = vmatpush2.msra.mxu0 0.0
  %461 = vmatprep.subr.mxu0 0.0
  %462 = vmatpush2.msra.mxu0 0.0
  %463 = vmatprep.subr.mxu0 0.0
  %464 = vmatpush2.msra.mxu0 0.0
  %465 = vmatprep.subr.mxu0 0.0
  %466 = vmatpush2.msra.mxu0 0.0
  %467 = vmatprep.mubr.f32.mxu0 0.0
  %468 = vmatmul.mubr.f32.gmra.mxu0 %v78
  %v469 = vpop.f32.mrf.mxu0
  %v470 = vadd.f32 0.0, %v469
  %v471 = vpop.f32.mrf.mxu0
  %472 = vmatprep.mubr.f32.mxu0 0.0
  %473 = vmatmul.mubr.f32.gmra.mxu0 %v81
  %v474 = vpop.f32.mrf.mxu0
  %v475 = vadd.f32 0.0, %v474
  %v476 = vpop.f32.mrf.mxu0
  %477 = vmatprep.mubr.f32.mxu0 0.0
  %478 = vmatmul.mubr.f32.gmra.mxu0 %v84
  %v479 = vpop.f32.mrf.mxu0
  %v480 = vadd.f32 0.0, %v479
  %v481 = vpop.f32.mrf.mxu0
  %482 = vmatprep.mubr.f32.mxu0 0.0
  %483 = vmatmul.mubr.f32.gmra.mxu0 %v87
  %v484 = vpop.f32.mrf.mxu0
  %v485 = vadd.f32 0.0, %v484
  %v486 = vpop.f32.mrf.mxu0
  %487 = vdwg.mxu0
  %v488 = vadd.f32 %v385, %v470
  %v489 = vadd.f32 %v390, %v475
  %v490 = vadd.f32 %v395, %v480
  %v491 = vadd.f32 %v400, %v485
  %v492 = vld [vmem:[%s7] sm:$0xff]
  %v493 = vld [vmem:[%s7 + $0x8] sm:$0xff]
  %v494 = vld [vmem:[%s7 + $0x10] sm:$0xff]
  %v495 = vld [vmem:[%s7 + $0x18] sm:$0xff]
  %v496 = vld [vmem:[%s7 + $0x20] sm:$0xff]
  %v497 = vld [vmem:[%s7 + $0x28] sm:$0xff]
  %v498 = vld [vmem:[%s7 + $0x30] sm:$0xff]
  %v499 = vld [vmem:[%s7 + $0x38] sm:$0xff]
  %v500 = vld [vmem:[%s8] sm:$0x1]
  %v502 = vlaneseq
  %v503 = vshrl.u32 %v502, 7
  %v504 = vsub.s32 0, %v503
  %v505 = vrot.slane %v500, %v504
  %v508 = vsel %vm305, %v488, 0
  %v511 = vsel %vm305, %v489, 0
  %v514 = vsel %vm305, %v490, 0
  %v517 = vsel %vm305, %v491, 0
  %519 = vmatprep.subr.mxu0 0.0
  %520 = vmatpush1.msra.mxu0 0.0
  %521 = vmatprep.subr.mxu0 0.0
  %522 = vmatpush1.msra.mxu0 0.0
  %523 = vmatprep.subr.mxu0 0.0
  %524 = vmatpush1.msra.mxu0 0.0
  %525 = vmatprep.subr.mxu0 0.0
  %526 = vmatpush1.msra.mxu0 0.0
  %527 = vmatprep.subr.mxu0 0.0
  %528 = vmatpush1.msra.mxu0 0.0
  %529 = vmatprep.subr.mxu0 0.0
  %530 = vmatpush1.msra.mxu0 0.0
  %531 = vmatprep.subr.mxu0 0.0
  %532 = vmatpush1.msra.mxu0 0.0
  %533 = vmatprep.subr.mxu0 0.0
  %534 = vmatpush1.msra.mxu0 0.0
  %535 = vmatprep.subr.mxu0 0.0
  %536 = vmatpush1.msra.mxu0 %v499
  %537 = vmatprep.subr.mxu0 0.0
  %538 = vmatpush1.msra.mxu0 %v498
  %539 = vmatprep.subr.mxu0 0.0
  %540 = vmatpush1.msra.mxu0 %v497
  %541 = vmatprep.subr.mxu0 0.0
  %542 = vmatpush1.msra.mxu0 %v496
  %543 = vmatprep.subr.mxu0 0.0
  %544 = vmatpush1.msra.mxu0 %v495
  %545 = vmatprep.subr.mxu0 0.0
  %546 = vmatpush1.msra.mxu0 %v494
  %547 = vmatprep.subr.mxu0 0.0
  %548 = vmatpush1.msra.mxu0 %v493
  %549 = vmatprep.subr.mxu0 0.0
  %550 = vmatpush1.msra.mxu0 %v492
  %551 = vmatprep.subr.mxu0 0.0
  %552 = vmatpush2.msra.mxu0 0.0
  %553 = vmatprep.subr.mxu0 0.0
  %554 = vmatpush2.msra.mxu0 0.0
  %555 = vmatprep.subr.mxu0 0.0
  %556 = vmatpush2.msra.mxu0 0.0
  %557 = vmatprep.subr.mxu0 0.0
  %558 = vmatpush2.msra.mxu0 0.0
  %559 = vmatprep.subr.mxu0 0.0
  %560 = vmatpush2.msra.mxu0 0.0
  %561 = vmatprep.subr.mxu0 0.0
  %562 = vmatpush2.msra.mxu0 0.0
  %563 = vmatprep.subr.mxu0 0.0
  %564 = vmatpush2.msra.mxu0 0.0
  %565 = vmatprep.subr.mxu0 0.0
  %566 = vmatpush2.msra.mxu0 0.0
  %567 = vmatprep.subr.mxu0 0.0
  %568 = vmatpush2.msra.mxu0 0.0
  %569 = vmatprep.subr.mxu0 0.0
  %570 = vmatpush2.msra.mxu0 0.0
  %571 = vmatprep.subr.mxu0 0.0
  %572 = vmatpush2.msra.mxu0 0.0
  %573 = vmatprep.subr.mxu0 0.0
  %574 = vmatpush2.msra.mxu0 0.0
  %575 = vmatprep.subr.mxu0 0.0
  %576 = vmatpush2.msra.mxu0 0.0
  %577 = vmatprep.subr.mxu0 0.0
  %578 = vmatpush2.msra.mxu0 0.0
  %579 = vmatprep.subr.mxu0 0.0
  %580 = vmatpush2.msra.mxu0 0.0
  %581 = vmatprep.subr.mxu0 0.0
  %582 = vmatpush2.msra.mxu0 0.0
  %583 = vmatprep.mubr.f32.mxu0 0.0
  %584 = vmatmul.mubr.f32.gmra.mxu0 %v508
  %v585 = vpop.f32.mrf.mxu0
  %v586 = vadd.f32 %v505, %v585
  %v587 = vpop.f32.mrf.mxu0
  %588 = vmatprep.mubr.f32.mxu0 0.0
  %589 = vmatmul.mubr.f32.gmra.mxu0 %v511
  %v590 = vpop.f32.mrf.mxu0
  %v591 = vadd.f32 %v505, %v590
  %v592 = vpop.f32.mrf.mxu0
  %593 = vmatprep.mubr.f32.mxu0 0.0
  %594 = vmatmul.mubr.f32.gmra.mxu0 %v514
  %v595 = vpop.f32.mrf.mxu0
  %v596 = vadd.f32 %v505, %v595
  %v597 = vpop.f32.mrf.mxu0
  %598 = vmatprep.mubr.f32.mxu0 0.0
  %599 = vmatmul.mubr.f32.gmra.mxu0 %v517
  %v600 = vpop.f32.mrf.mxu0
  %v601 = vadd.f32 %v505, %v600
  %v602 = vpop.f32.mrf.mxu0
  %603 = vdwg.mxu0
  %v604 = vmax.f32 %v586, 0.0
  %v605 = vmax.f32 %v591, 0.0
  %v606 = vmax.f32 %v596, 0.0
  %v607 = vmax.f32 %v601, 0.0
  %v608 = vld [vmem:[%s9] sm:$0xff]
  %v609 = vld [vmem:[%s9 + $0x8] sm:$0xff]
  %v610 = vld [vmem:[%s9 + $0x10] sm:$0xff]
  %v611 = vld [vmem:[%s9 + $0x18] sm:$0xff]
  %v612 = vld [vmem:[%s9 + $0x20] sm:$0xff]
  %v613 = vld [vmem:[%s9 + $0x28] sm:$0xff]
  %v614 = vld [vmem:[%s9 + $0x30] sm:$0xff]
  %v615 = vld [vmem:[%s9 + $0x38] sm:$0xff]
  %v616 = vld [vmem:[%s10] sm:$0x1]
  %v618 = vlaneseq
  %v619 = vshrl.u32 %v618, 7
  %v620 = vsub.s32 0, %v619
  %v621 = vrot.slane %v616, %v620
  %v624 = vsel %vm305, %v604, 0
  %v627 = vsel %vm305, %v605, 0
  %v630 = vsel %vm305, %v606, 0
  %v633 = vsel %vm305, %v607, 0
  %635 = vmatprep.subr.mxu0 0.0
  %636 = vmatpush1.msra.mxu0 0.0
  %637 = vmatprep.subr.mxu0 0.0
  %638 = vmatpush1.msra.mxu0 0.0
  %639 = vmatprep.subr.mxu0 0.0
  %640 = vmatpush1.msra.mxu0 0.0
  %641 = vmatprep.subr.mxu0 0.0
  %642 = vmatpush1.msra.mxu0 0.0
  %643 = vmatprep.subr.mxu0 0.0
  %644 = vmatpush1.msra.mxu0 0.0
  %645 = vmatprep.subr.mxu0 0.0
  %646 = vmatpush1.msra.mxu0 0.0
  %647 = vmatprep.subr.mxu0 0.0
  %648 = vmatpush1.msra.mxu0 0.0
  %649 = vmatprep.subr.mxu0 0.0
  %650 = vmatpush1.msra.mxu0 0.0
  %651 = vmatprep.subr.mxu0 0.0
  %652 = vmatpush1.msra.mxu0 %v615
  %653 = vmatprep.subr.mxu0 0.0
  %654 = vmatpush1.msra.mxu0 %v614
  %655 = vmatprep.subr.mxu0 0.0
  %656 = vmatpush1.msra.mxu0 %v613
  %657 = vmatprep.subr.mxu0 0.0
  %658 = vmatpush1.msra.mxu0 %v612
  %659 = vmatprep.subr.mxu0 0.0
  %660 = vmatpush1.msra.mxu0 %v611
  %661 = vmatprep.subr.mxu0 0.0
  %662 = vmatpush1.msra.mxu0 %v610
  %663 = vmatprep.subr.mxu0 0.0
  %664 = vmatpush1.msra.mxu0 %v609
  %665 = vmatprep.subr.mxu0 0.0
  %666 = vmatpush1.msra.mxu0 %v608
  %667 = vmatprep.subr.mxu0 0.0
  %668 = vmatpush2.msra.mxu0 0.0
  %669 = vmatprep.subr.mxu0 0.0
  %670 = vmatpush2.msra.mxu0 0.0
  %671 = vmatprep.subr.mxu0 0.0
  %672 = vmatpush2.msra.mxu0 0.0
  %673 = vmatprep.subr.mxu0 0.0
  %674 = vmatpush2.msra.mxu0 0.0
  %675 = vmatprep.subr.mxu0 0.0
  %676 = vmatpush2.msra.mxu0 0.0
  %677 = vmatprep.subr.mxu0 0.0
  %678 = vmatpush2.msra.mxu0 0.0
  %679 = vmatprep.subr.mxu0 0.0
  %680 = vmatpush2.msra.mxu0 0.0
  %681 = vmatprep.subr.mxu0 0.0
  %682 = vmatpush2.msra.mxu0 0.0
  %683 = vmatprep.subr.mxu0 0.0
  %684 = vmatpush2.msra.mxu0 0.0
  %685 = vmatprep.subr.mxu0 0.0
  %686 = vmatpush2.msra.mxu0 0.0
  %687 = vmatprep.subr.mxu0 0.0
  %688 = vmatpush2.msra.mxu0 0.0
  %689 = vmatprep.subr.mxu0 0.0
  %690 = vmatpush2.msra.mxu0 0.0
  %691 = vmatprep.subr.mxu0 0.0
  %692 = vmatpush2.msra.mxu0 0.0
  %693 = vmatprep.subr.mxu0 0.0
  %694 = vmatpush2.msra.mxu0 0.0
  %695 = vmatprep.subr.mxu0 0.0
  %696 = vmatpush2.msra.mxu0 0.0
  %697 = vmatprep.subr.mxu0 0.0
  %698 = vmatpush2.msra.mxu0 0.0
  %699 = vmatprep.mubr.f32.mxu0 0.0
  %700 = vmatmul.mubr.f32.gmra.mxu0 %v624
  %v701 = vpop.f32.mrf.mxu0
  %v702 = vadd.f32 %v621, %v701
  %v703 = vpop.f32.mrf.mxu0
  %704 = vmatprep.mubr.f32.mxu0 0.0
  %705 = vmatmul.mubr.f32.gmra.mxu0 %v627
  %v706 = vpop.f32.mrf.mxu0
  %v707 = vadd.f32 %v621, %v706
  %v708 = vpop.f32.mrf.mxu0
  %709 = vmatprep.mubr.f32.mxu0 0.0
  %710 = vmatmul.mubr.f32.gmra.mxu0 %v630
  %v711 = vpop.f32.mrf.mxu0
  %v712 = vadd.f32 %v621, %v711
  %v713 = vpop.f32.mrf.mxu0
  %714 = vmatprep.mubr.f32.mxu0 0.0
  %715 = vmatmul.mubr.f32.gmra.mxu0 %v633
  %v716 = vpop.f32.mrf.mxu0
  %v717 = vadd.f32 %v621, %v716
  %v718 = vpop.f32.mrf.mxu0
  %719 = vdwg.mxu0
  %720 = vmatprep.subr.mxu0 0.0
  %721 = vmatpush1.msra.mxu0 0.0
  %722 = vmatprep.subr.mxu0 0.0
  %723 = vmatpush1.msra.mxu0 0.0
  %724 = vmatprep.subr.mxu0 0.0
  %725 = vmatpush1.msra.mxu0 0.0
  %726 = vmatprep.subr.mxu0 0.0
  %727 = vmatpush1.msra.mxu0 0.0
  %728 = vmatprep.subr.mxu0 0.0
  %729 = vmatpush1.msra.mxu0 0.0
  %730 = vmatprep.subr.mxu0 0.0
  %731 = vmatpush1.msra.mxu0 0.0
  %732 = vmatprep.subr.mxu0 0.0
  %733 = vmatpush1.msra.mxu0 0.0
  %734 = vmatprep.subr.mxu0 0.0
  %735 = vmatpush1.msra.mxu0 0.0
  %736 = vmatprep.subr.mxu0 0.0
  %737 = vmatpush1.msra.mxu0 0.0
  %738 = vmatprep.subr.mxu0 0.0
  %739 = vmatpush1.msra.mxu0 0.0
  %740 = vmatprep.subr.mxu0 0.0
  %741 = vmatpush1.msra.mxu0 0.0
  %742 = vmatprep.subr.mxu0 0.0
  %743 = vmatpush1.msra.mxu0 0.0
  %744 = vmatprep.subr.mxu0 0.0
  %745 = vmatpush1.msra.mxu0 %v717
  %746 = vmatprep.subr.mxu0 0.0
  %747 = vmatpush1.msra.mxu0 %v712
  %748 = vmatprep.subr.mxu0 0.0
  %749 = vmatpush1.msra.mxu0 %v707
  %750 = vmatprep.subr.mxu0 0.0
  %751 = vmatpush1.msra.mxu0 %v702
  %752 = vmatprep.subr.mxu0 0.0
  %753 = vmatpush2.msra.mxu0 0.0
  %754 = vmatprep.subr.mxu0 0.0
  %755 = vmatpush2.msra.mxu0 0.0
  %756 = vmatprep.subr.mxu0 0.0
  %757 = vmatpush2.msra.mxu0 0.0
  %758 = vmatprep.subr.mxu0 0.0
  %759 = vmatpush2.msra.mxu0 0.0
  %760 = vmatprep.subr.mxu0 0.0
  %761 = vmatpush2.msra.mxu0 0.0
  %762 = vmatprep.subr.mxu0 0.0
  %763 = vmatpush2.msra.mxu0 0.0
  %764 = vmatprep.subr.mxu0 0.0
  %765 = vmatpush2.msra.mxu0 0.0
  %766 = vmatprep.subr.mxu0 0.0
  %767 = vmatpush2.msra.mxu0 0.0
  %768 = vmatprep.subr.mxu0 0.0
  %769 = vmatpush2.msra.mxu0 0.0
  %770 = vmatprep.subr.mxu0 0.0
  %771 = vmatpush2.msra.mxu0 0.0
  %772 = vmatprep.subr.mxu0 0.0
  %773 = vmatpush2.msra.mxu0 0.0
  %774 = vmatprep.subr.mxu0 0.0
  %775 = vmatpush2.msra.mxu0 0.0
  %776 = vmatprep.subr.mxu0 0.0
  %777 = vmatpush2.msra.mxu0 0.0
  %778 = vmatprep.subr.mxu0 0.0
  %779 = vmatpush2.msra.mxu0 0.0
  %780 = vmatprep.subr.mxu0 0.0
  %781 = vmatpush2.msra.mxu0 0.0
  %782 = vmatprep.subr.mxu0 0.0
  %783 = vmatpush2.msra.mxu0 0.0
  %784 = vmatprep.mubr.f32.mxu0 0.0
  %785 = vmatmul.mubr.f32.gmra.mxu0 %v78
  %v786 = vpop.f32.mrf.mxu0
  %v787 = vadd.f32 0.0, %v786
  %v788 = vpop.f32.mrf.mxu0
  %789 = vmatprep.mubr.f32.mxu0 0.0
  %790 = vmatmul.mubr.f32.gmra.mxu0 %v81
  %v791 = vpop.f32.mrf.mxu0
  %v792 = vadd.f32 0.0, %v791
  %v793 = vpop.f32.mrf.mxu0
  %794 = vmatprep.mubr.f32.mxu0 0.0
  %795 = vmatmul.mubr.f32.gmra.mxu0 %v84
  %v796 = vpop.f32.mrf.mxu0
  %v797 = vadd.f32 0.0, %v796
  %v798 = vpop.f32.mrf.mxu0
  %799 = vmatprep.mubr.f32.mxu0 0.0
  %800 = vmatmul.mubr.f32.gmra.mxu0 %v87
  %v801 = vpop.f32.mrf.mxu0
  %v802 = vadd.f32 0.0, %v801
  %v803 = vpop.f32.mrf.mxu0
  %804 = vdwg.mxu0
  %v805 = vadd.f32 %v702, %v787
  %v806 = vadd.f32 %v707, %v792
  %v807 = vadd.f32 %v712, %v797
  %v808 = vadd.f32 %v717, %v802
  %v809 = vld [vmem:[%s11] sm:$0xff]
  %v810 = vld [vmem:[%s11 + $0x8] sm:$0xff]
  %v811 = vld [vmem:[%s11 + $0x10] sm:$0xff]
  %v812 = vld [vmem:[%s11 + $0x18] sm:$0xff]
  %v813 = vld [vmem:[%s11 + $0x20] sm:$0xff]
  %v814 = vld [vmem:[%s11 + $0x28] sm:$0xff]
  %v815 = vld [vmem:[%s11 + $0x30] sm:$0xff]
  %v816 = vld [vmem:[%s11 + $0x38] sm:$0xff]
  %v817 = vld [vmem:[%s12] sm:$0x1]
  %v819 = vlaneseq
  %v820 = vshrl.u32 %v819, 7
  %v821 = vsub.s32 0, %v820
  %v822 = vrot.slane %v817, %v821
  %v825 = vsel %vm305, %v805, 0
  %v828 = vsel %vm305, %v806, 0
  %v831 = vsel %vm305, %v807, 0
  %v834 = vsel %vm305, %v808, 0
  %836 = vmatprep.subr.mxu0 0.0
  %837 = vmatpush1.msra.mxu0 0.0
  %838 = vmatprep.subr.mxu0 0.0
  %839 = vmatpush1.msra.mxu0 0.0
  %840 = vmatprep.subr.mxu0 0.0
  %841 = vmatpush1.msra.mxu0 0.0
  %842 = vmatprep.subr.mxu0 0.0
  %843 = vmatpush1.msra.mxu0 0.0
  %844 = vmatprep.subr.mxu0 0.0
  %845 = vmatpush1.msra.mxu0 0.0
  %846 = vmatprep.subr.mxu0 0.0
  %847 = vmatpush1.msra.mxu0 0.0
  %848 = vmatprep.subr.mxu0 0.0
  %849 = vmatpush1.msra.mxu0 0.0
  %850 = vmatprep.subr.mxu0 0.0
  %851 = vmatpush1.msra.mxu0 0.0
  %852 = vmatprep.subr.mxu0 0.0
  %853 = vmatpush1.msra.mxu0 %v816
  %854 = vmatprep.subr.mxu0 0.0
  %855 = vmatpush1.msra.mxu0 %v815
  %856 = vmatprep.subr.mxu0 0.0
  %857 = vmatpush1.msra.mxu0 %v814
  %858 = vmatprep.subr.mxu0 0.0
  %859 = vmatpush1.msra.mxu0 %v813
  %860 = vmatprep.subr.mxu0 0.0
  %861 = vmatpush1.msra.mxu0 %v812
  %862 = vmatprep.subr.mxu0 0.0
  %863 = vmatpush1.msra.mxu0 %v811
  %864 = vmatprep.subr.mxu0 0.0
  %865 = vmatpush1.msra.mxu0 %v810
  %866 = vmatprep.subr.mxu0 0.0
  %867 = vmatpush1.msra.mxu0 %v809
  %868 = vmatprep.subr.mxu0 0.0
  %869 = vmatpush2.msra.mxu0 0.0
  %870 = vmatprep.subr.mxu0 0.0
  %871 = vmatpush2.msra.mxu0 0.0
  %872 = vmatprep.subr.mxu0 0.0
  %873 = vmatpush2.msra.mxu0 0.0
  %874 = vmatprep.subr.mxu0 0.0
  %875 = vmatpush2.msra.mxu0 0.0
  %876 = vmatprep.subr.mxu0 0.0
  %877 = vmatpush2.msra.mxu0 0.0
  %878 = vmatprep.subr.mxu0 0.0
  %879 = vmatpush2.msra.mxu0 0.0
  %880 = vmatprep.subr.mxu0 0.0
  %881 = vmatpush2.msra.mxu0 0.0
  %882 = vmatprep.subr.mxu0 0.0
  %883 = vmatpush2.msra.mxu0 0.0
  %884 = vmatprep.subr.mxu0 0.0
  %885 = vmatpush2.msra.mxu0 0.0
  %886 = vmatprep.subr.mxu0 0.0
  %887 = vmatpush2.msra.mxu0 0.0
  %888 = vmatprep.subr.mxu0 0.0
  %889 = vmatpush2.msra.mxu0 0.0
  %890 = vmatprep.subr.mxu0 0.0
  %891 = vmatpush2.msra.mxu0 0.0
  %892 = vmatprep.subr.mxu0 0.0
  %893 = vmatpush2.msra.mxu0 0.0
  %894 = vmatprep.subr.mxu0 0.0
  %895 = vmatpush2.msra.mxu0 0.0
  %896 = vmatprep.subr.mxu0 0.0
  %897 = vmatpush2.msra.mxu0 0.0
  %898 = vmatprep.subr.mxu0 0.0
  %899 = vmatpush2.msra.mxu0 0.0
  %900 = vmatprep.mubr.f32.mxu0 0.0
  %901 = vmatmul.mubr.f32.gmra.mxu0 %v825
  %v902 = vpop.f32.mrf.mxu0
  %v903 = vadd.f32 %v822, %v902
  %v904 = vpop.f32.mrf.mxu0
  %905 = vmatprep.mubr.f32.mxu0 0.0
  %906 = vmatmul.mubr.f32.gmra.mxu0 %v828
  %v907 = vpop.f32.mrf.mxu0
  %v908 = vadd.f32 %v822, %v907
  %v909 = vpop.f32.mrf.mxu0
  %910 = vmatprep.mubr.f32.mxu0 0.0
  %911 = vmatmul.mubr.f32.gmra.mxu0 %v831
  %v912 = vpop.f32.mrf.mxu0
  %v913 = vadd.f32 %v822, %v912
  %v914 = vpop.f32.mrf.mxu0
  %915 = vmatprep.mubr.f32.mxu0 0.0
  %916 = vmatmul.mubr.f32.gmra.mxu0 %v834
  %v917 = vpop.f32.mrf.mxu0
  %v918 = vadd.f32 %v822, %v917
  %v919 = vpop.f32.mrf.mxu0
  %920 = vdwg.mxu0
  %v921 = vmax.f32 %v903, 0.0
  %v922 = vmax.f32 %v908, 0.0
  %v923 = vmax.f32 %v913, 0.0
  %v924 = vmax.f32 %v918, 0.0
  %v925 = vld [vmem:[%s13] sm:$0xff]
  %v926 = vld [vmem:[%s13 + $0x8] sm:$0xff]
  %v927 = vld [vmem:[%s13 + $0x10] sm:$0xff]
  %v928 = vld [vmem:[%s13 + $0x18] sm:$0xff]
  %v929 = vld [vmem:[%s13 + $0x20] sm:$0xff]
  %v930 = vld [vmem:[%s13 + $0x28] sm:$0xff]
  %v931 = vld [vmem:[%s13 + $0x30] sm:$0xff]
  %v932 = vld [vmem:[%s13 + $0x38] sm:$0xff]
  %v933 = vld [vmem:[%s14] sm:$0x1]
  %v935 = vlaneseq
  %v936 = vshrl.u32 %v935, 7
  %v937 = vsub.s32 0, %v936
  %v938 = vrot.slane %v933, %v937
  %v941 = vsel %vm305, %v921, 0
  %v944 = vsel %vm305, %v922, 0
  %v947 = vsel %vm305, %v923, 0
  %v950 = vsel %vm305, %v924, 0
  %952 = vmatprep.subr.mxu0 0.0
  %953 = vmatpush1.msra.mxu0 0.0
  %954 = vmatprep.subr.mxu0 0.0
  %955 = vmatpush1.msra.mxu0 0.0
  %956 = vmatprep.subr.mxu0 0.0
  %957 = vmatpush1.msra.mxu0 0.0
  %958 = vmatprep.subr.mxu0 0.0
  %959 = vmatpush1.msra.mxu0 0.0
  %960 = vmatprep.subr.mxu0 0.0
  %961 = vmatpush1.msra.mxu0 0.0
  %962 = vmatprep.subr.mxu0 0.0
  %963 = vmatpush1.msra.mxu0 0.0
  %964 = vmatprep.subr.mxu0 0.0
  %965 = vmatpush1.msra.mxu0 0.0
  %966 = vmatprep.subr.mxu0 0.0
  %967 = vmatpush1.msra.mxu0 0.0
  %968 = vmatprep.subr.mxu0 0.0
  %969 = vmatpush1.msra.mxu0 %v932
  %970 = vmatprep.subr.mxu0 0.0
  %971 = vmatpush1.msra.mxu0 %v931
  %972 = vmatprep.subr.mxu0 0.0
  %973 = vmatpush1.msra.mxu0 %v930
  %974 = vmatprep.subr.mxu0 0.0
  %975 = vmatpush1.msra.mxu0 %v929
  %976 = vmatprep.subr.mxu0 0.0
  %977 = vmatpush1.msra.mxu0 %v928
  %978 = vmatprep.subr.mxu0 0.0
  %979 = vmatpush1.msra.mxu0 %v927
  %980 = vmatprep.subr.mxu0 0.0
  %981 = vmatpush1.msra.mxu0 %v926
  %982 = vmatprep.subr.mxu0 0.0
  %983 = vmatpush1.msra.mxu0 %v925
  %984 = vmatprep.subr.mxu0 0.0
  %985 = vmatpush2.msra.mxu0 0.0
  %986 = vmatprep.subr.mxu0 0.0
  %987 = vmatpush2.msra.mxu0 0.0
  %988 = vmatprep.subr.mxu0 0.0
  %989 = vmatpush2.msra.mxu0 0.0
  %990 = vmatprep.subr.mxu0 0.0
  %991 = vmatpush2.msra.mxu0 0.0
  %992 = vmatprep.subr.mxu0 0.0
  %993 = vmatpush2.msra.mxu0 0.0
  %994 = vmatprep.subr.mxu0 0.0
  %995 = vmatpush2.msra.mxu0 0.0
  %996 = vmatprep.subr.mxu0 0.0
  %997 = vmatpush2.msra.mxu0 0.0
  %998 = vmatprep.subr.mxu0 0.0
  %999 = vmatpush2.msra.mxu0 0.0
  %1000 = vmatprep.subr.mxu0 0.0
  %1001 = vmatpush2.msra.mxu0 0.0
  %1002 = vmatprep.subr.mxu0 0.0
  %1003 = vmatpush2.msra.mxu0 0.0
  %1004 = vmatprep.subr.mxu0 0.0
  %1005 = vmatpush2.msra.mxu0 0.0
  %1006 = vmatprep.subr.mxu0 0.0
  %1007 = vmatpush2.msra.mxu0 0.0
  %1008 = vmatprep.subr.mxu0 0.0
  %1009 = vmatpush2.msra.mxu0 0.0
  %1010 = vmatprep.subr.mxu0 0.0
  %1011 = vmatpush2.msra.mxu0 0.0
  %1012 = vmatprep.subr.mxu0 0.0
  %1013 = vmatpush2.msra.mxu0 0.0
  %1014 = vmatprep.subr.mxu0 0.0
  %1015 = vmatpush2.msra.mxu0 0.0
  %1016 = vmatprep.mubr.f32.mxu0 0.0
  %1017 = vmatmul.mubr.f32.gmra.mxu0 %v941
  %v1018 = vpop.f32.mrf.mxu0
  %v1019 = vadd.f32 %v938, %v1018
  %v1020 = vpop.f32.mrf.mxu0
  %1021 = vmatprep.mubr.f32.mxu0 0.0
  %1022 = vmatmul.mubr.f32.gmra.mxu0 %v944
  %v1023 = vpop.f32.mrf.mxu0
  %v1024 = vadd.f32 %v938, %v1023
  %v1025 = vpop.f32.mrf.mxu0
  %1026 = vmatprep.mubr.f32.mxu0 0.0
  %1027 = vmatmul.mubr.f32.gmra.mxu0 %v947
  %v1028 = vpop.f32.mrf.mxu0
  %v1029 = vadd.f32 %v938, %v1028
  %v1030 = vpop.f32.mrf.mxu0
  %1031 = vmatprep.mubr.f32.mxu0 0.0
  %1032 = vmatmul.mubr.f32.gmra.mxu0 %v950
  %v1033 = vpop.f32.mrf.mxu0
  %v1034 = vadd.f32 %v938, %v1033
  %v1035 = vpop.f32.mrf.mxu0
  %1036 = vdwg.mxu0
  %v1037 = vld [vmem:[%s2] sm:$0xff]
  %v1039 = vsel %vm76, %v1037, 0
  %1041 = vmatprep.subr.mxu0 0.0
  %1042 = vmatpush1.msra.mxu0 0.0
  %1043 = vmatprep.subr.mxu0 0.0
  %1044 = vmatpush1.msra.mxu0 0.0
  %1045 = vmatprep.subr.mxu0 0.0
  %1046 = vmatpush1.msra.mxu0 0.0
  %1047 = vmatprep.subr.mxu0 0.0
  %1048 = vmatpush1.msra.mxu0 0.0
  %1049 = vmatprep.subr.mxu0 0.0
  %1050 = vmatpush1.msra.mxu0 0.0
  %1051 = vmatprep.subr.mxu0 0.0
  %1052 = vmatpush1.msra.mxu0 0.0
  %1053 = vmatprep.subr.mxu0 0.0
  %1054 = vmatpush1.msra.mxu0 0.0
  %1055 = vmatprep.subr.mxu0 0.0
  %1056 = vmatpush1.msra.mxu0 0.0
  %1057 = vmatprep.subr.mxu0 0.0
  %1058 = vmatpush1.msra.mxu0 0.0
  %1059 = vmatprep.subr.mxu0 0.0
  %1060 = vmatpush1.msra.mxu0 0.0
  %1061 = vmatprep.subr.mxu0 0.0
  %1062 = vmatpush1.msra.mxu0 0.0
  %1063 = vmatprep.subr.mxu0 0.0
  %1064 = vmatpush1.msra.mxu0 0.0
  %1065 = vmatprep.subr.mxu0 0.0
  %1066 = vmatpush1.msra.mxu0 %v400
  %1067 = vmatprep.subr.mxu0 0.0
  %1068 = vmatpush1.msra.mxu0 %v395
  %1069 = vmatprep.subr.mxu0 0.0
  %1070 = vmatpush1.msra.mxu0 %v390
  %1071 = vmatprep.subr.mxu0 0.0
  %1072 = vmatpush1.msra.mxu0 %v385
  %1073 = vmatprep.subr.mxu0 0.0
  %1074 = vmatpush2.msra.mxu0 0.0
  %1075 = vmatprep.subr.mxu0 0.0
  %1076 = vmatpush2.msra.mxu0 0.0
  %1077 = vmatprep.subr.mxu0 0.0
  %1078 = vmatpush2.msra.mxu0 0.0
  %1079 = vmatprep.subr.mxu0 0.0
  %1080 = vmatpush2.msra.mxu0 0.0
  %1081 = vmatprep.subr.mxu0 0.0
  %1082 = vmatpush2.msra.mxu0 0.0
  %1083 = vmatprep.subr.mxu0 0.0
  %1084 = vmatpush2.msra.mxu0 0.0
  %1085 = vmatprep.subr.mxu0 0.0
  %1086 = vmatpush2.msra.mxu0 0.0
  %1087 = vmatprep.subr.mxu0 0.0
  %1088 = vmatpush2.msra.mxu0 0.0
  %1089 = vmatprep.subr.mxu0 0.0
  %1090 = vmatpush2.msra.mxu0 0.0
  %1091 = vmatprep.subr.mxu0 0.0
  %1092 = vmatpush2.msra.mxu0 0.0
  %1093 = vmatprep.subr.mxu0 0.0
  %1094 = vmatpush2.msra.mxu0 0.0
  %1095 = vmatprep.subr.mxu0 0.0
  %1096 = vmatpush2.msra.mxu0 0.0
  %1097 = vmatprep.subr.mxu0 0.0
  %1098 = vmatpush2.msra.mxu0 0.0
  %1099 = vmatprep.subr.mxu0 0.0
  %1100 = vmatpush2.msra.mxu0 0.0
  %1101 = vmatprep.subr.mxu0 0.0
  %1102 = vmatpush2.msra.mxu0 0.0
  %1103 = vmatprep.subr.mxu0 0.0
  %1104 = vmatpush2.msra.mxu0 0.0
  %1105 = vmatprep.mubr.f32.mxu0 0.0
  %1106 = vmatmul.mubr.f32.gmra.mxu0 %v1039
  %v1107 = vpop.f32.mrf.mxu0
  %v1108 = vadd.f32 0.0, %v1107
  %v1109 = vpop.f32.mrf.mxu0
  %1110 = vdwg.mxu0
  %1111 = vmatprep.subr.mxu0 0.0
  %1112 = vmatpush1.msra.mxu0 0.0
  %1113 = vmatprep.subr.mxu0 0.0
  %1114 = vmatpush1.msra.mxu0 0.0
  %1115 = vmatprep.subr.mxu0 0.0
  %1116 = vmatpush1.msra.mxu0 0.0
  %1117 = vmatprep.subr.mxu0 0.0
  %1118 = vmatpush1.msra.mxu0 0.0
  %1119 = vmatprep.subr.mxu0 0.0
  %1120 = vmatpush1.msra.mxu0 0.0
  %1121 = vmatprep.subr.mxu0 0.0
  %1122 = vmatpush1.msra.mxu0 0.0
  %1123 = vmatprep.subr.mxu0 0.0
  %1124 = vmatpush1.msra.mxu0 0.0
  %1125 = vmatprep.subr.mxu0 0.0
  %1126 = vmatpush1.msra.mxu0 0.0
  %1127 = vmatprep.subr.mxu0 0.0
  %1128 = vmatpush1.msra.mxu0 0.0
  %1129 = vmatprep.subr.mxu0 0.0
  %1130 = vmatpush1.msra.mxu0 0.0
  %1131 = vmatprep.subr.mxu0 0.0
  %1132 = vmatpush1.msra.mxu0 0.0
  %1133 = vmatprep.subr.mxu0 0.0
  %1134 = vmatpush1.msra.mxu0 0.0
  %1135 = vmatprep.subr.mxu0 0.0
  %1136 = vmatpush1.msra.mxu0 %v717
  %1137 = vmatprep.subr.mxu0 0.0
  %1138 = vmatpush1.msra.mxu0 %v712
  %1139 = vmatprep.subr.mxu0 0.0
  %1140 = vmatpush1.msra.mxu0 %v707
  %1141 = vmatprep.subr.mxu0 0.0
  %1142 = vmatpush1.msra.mxu0 %v702
  %1143 = vmatprep.subr.mxu0 0.0
  %1144 = vmatpush2.msra.mxu0 0.0
  %1145 = vmatprep.subr.mxu0 0.0
  %1146 = vmatpush2.msra.mxu0 0.0
  %1147 = vmatprep.subr.mxu0 0.0
  %1148 = vmatpush2.msra.mxu0 0.0
  %1149 = vmatprep.subr.mxu0 0.0
  %1150 = vmatpush2.msra.mxu0 0.0
  %1151 = vmatprep.subr.mxu0 0.0
  %1152 = vmatpush2.msra.mxu0 0.0
  %1153 = vmatprep.subr.mxu0 0.0
  %1154 = vmatpush2.msra.mxu0 0.0
  %1155 = vmatprep.subr.mxu0 0.0
  %1156 = vmatpush2.msra.mxu0 0.0
  %1157 = vmatprep.subr.mxu0 0.0
  %1158 = vmatpush2.msra.mxu0 0.0
  %1159 = vmatprep.subr.mxu0 0.0
  %1160 = vmatpush2.msra.mxu0 0.0
  %1161 = vmatprep.subr.mxu0 0.0
  %1162 = vmatpush2.msra.mxu0 0.0
  %1163 = vmatprep.subr.mxu0 0.0
  %1164 = vmatpush2.msra.mxu0 0.0
  %1165 = vmatprep.subr.mxu0 0.0
  %1166 = vmatpush2.msra.mxu0 0.0
  %1167 = vmatprep.subr.mxu0 0.0
  %1168 = vmatpush2.msra.mxu0 0.0
  %1169 = vmatprep.subr.mxu0 0.0
  %1170 = vmatpush2.msra.mxu0 0.0
  %1171 = vmatprep.subr.mxu0 0.0
  %1172 = vmatpush2.msra.mxu0 0.0
  %1173 = vmatprep.subr.mxu0 0.0
  %1174 = vmatpush2.msra.mxu0 0.0
  %1175 = vmatprep.mubr.f32.mxu0 0.0
  %1176 = vmatmul.mubr.f32.gmra.mxu0 %v1039
  %v1177 = vpop.f32.mrf.mxu0
  %v1178 = vadd.f32 0.0, %v1177
  %v1179 = vpop.f32.mrf.mxu0
  %1180 = vdwg.mxu0
  %1181 = vmatprep.subr.mxu0 0.0
  %1182 = vmatpush1.msra.mxu0 0.0
  %1183 = vmatprep.subr.mxu0 0.0
  %1184 = vmatpush1.msra.mxu0 0.0
  %1185 = vmatprep.subr.mxu0 0.0
  %1186 = vmatpush1.msra.mxu0 0.0
  %1187 = vmatprep.subr.mxu0 0.0
  %1188 = vmatpush1.msra.mxu0 0.0
  %1189 = vmatprep.subr.mxu0 0.0
  %1190 = vmatpush1.msra.mxu0 0.0
  %1191 = vmatprep.subr.mxu0 0.0
  %1192 = vmatpush1.msra.mxu0 0.0
  %1193 = vmatprep.subr.mxu0 0.0
  %1194 = vmatpush1.msra.mxu0 0.0
  %1195 = vmatprep.subr.mxu0 0.0
  %1196 = vmatpush1.msra.mxu0 0.0
  %1197 = vmatprep.subr.mxu0 0.0
  %1198 = vmatpush1.msra.mxu0 0.0
  %1199 = vmatprep.subr.mxu0 0.0
  %1200 = vmatpush1.msra.mxu0 0.0
  %1201 = vmatprep.subr.mxu0 0.0
  %1202 = vmatpush1.msra.mxu0 0.0
  %1203 = vmatprep.subr.mxu0 0.0
  %1204 = vmatpush1.msra.mxu0 0.0
  %1205 = vmatprep.subr.mxu0 0.0
  %1206 = vmatpush1.msra.mxu0 %v1034
  %1207 = vmatprep.subr.mxu0 0.0
  %1208 = vmatpush1.msra.mxu0 %v1029
  %1209 = vmatprep.subr.mxu0 0.0
  %1210 = vmatpush1.msra.mxu0 %v1024
  %1211 = vmatprep.subr.mxu0 0.0
  %1212 = vmatpush1.msra.mxu0 %v1019
  %1213 = vmatprep.subr.mxu0 0.0
  %1214 = vmatpush2.msra.mxu0 0.0
  %1215 = vmatprep.subr.mxu0 0.0
  %1216 = vmatpush2.msra.mxu0 0.0
  %1217 = vmatprep.subr.mxu0 0.0
  %1218 = vmatpush2.msra.mxu0 0.0
  %1219 = vmatprep.subr.mxu0 0.0
  %1220 = vmatpush2.msra.mxu0 0.0
  %1221 = vmatprep.subr.mxu0 0.0
  %1222 = vmatpush2.msra.mxu0 0.0
  %1223 = vmatprep.subr.mxu0 0.0
  %1224 = vmatpush2.msra.mxu0 0.0
  %1225 = vmatprep.subr.mxu0 0.0
  %1226 = vmatpush2.msra.mxu0 0.0
  %1227 = vmatprep.subr.mxu0 0.0
  %1228 = vmatpush2.msra.mxu0 0.0
  %1229 = vmatprep.subr.mxu0 0.0
  %1230 = vmatpush2.msra.mxu0 0.0
  %1231 = vmatprep.subr.mxu0 0.0
  %1232 = vmatpush2.msra.mxu0 0.0
  %1233 = vmatprep.subr.mxu0 0.0
  %1234 = vmatpush2.msra.mxu0 0.0
  %1235 = vmatprep.subr.mxu0 0.0
  %1236 = vmatpush2.msra.mxu0 0.0
  %1237 = vmatprep.subr.mxu0 0.0
  %1238 = vmatpush2.msra.mxu0 0.0
  %1239 = vmatprep.subr.mxu0 0.0
  %1240 = vmatpush2.msra.mxu0 0.0
  %1241 = vmatprep.subr.mxu0 0.0
  %1242 = vmatpush2.msra.mxu0 0.0
  %1243 = vmatprep.subr.mxu0 0.0
  %1244 = vmatpush2.msra.mxu0 0.0
  %1245 = vmatprep.mubr.f32.mxu0 0.0
  %1246 = vmatmul.mubr.f32.gmra.mxu0 %v1039
  %v1247 = vpop.f32.mrf.mxu0
  %v1248 = vadd.f32 0.0, %v1247
  %v1249 = vpop.f32.mrf.mxu0
  %1250 = vdwg.mxu0
  %v1251 = vld [vmem:[%s15] sm:$0xff]
  %v1252 = vld [vmem:[%s15 + $0x8] sm:$0xff]
  %v1253 = vld [vmem:[%s15 + $0x10] sm:$0xff]
  %v1254 = vld [vmem:[%s15 + $0x18] sm:$0xff]
  %v1255 = vld [vmem:[%s15 + $0x20] sm:$0xff]
  %v1256 = vld [vmem:[%s15 + $0x28] sm:$0xff]
  %v1257 = vld [vmem:[%s15 + $0x30] sm:$0xff]
  %v1258 = vld [vmem:[%s15 + $0x38] sm:$0xff]
  %v1259 = vld [vmem:[%s16] sm:$0xff]
  %v1260 = vld [vmem:[%s16 + $0x8] sm:$0xff]
  %v1261 = vld [vmem:[%s16 + $0x10] sm:$0xff]
  %v1262 = vld [vmem:[%s16 + $0x18] sm:$0xff]
  %v1263 = vld [vmem:[%s16 + $0x20] sm:$0xff]
  %v1264 = vld [vmem:[%s16 + $0x28] sm:$0xff]
  %v1265 = vld [vmem:[%s16 + $0x30] sm:$0xff]
  %v1266 = vld [vmem:[%s16 + $0x38] sm:$0xff]
  %v1268 = vsel %vm305, %v1178, 0
  %1270 = vmatprep.subr.mxu0 0.0
  %1271 = vmatpush1.msra.mxu0 0.0
  %1272 = vmatprep.subr.mxu0 0.0
  %1273 = vmatpush1.msra.mxu0 0.0
  %1274 = vmatprep.subr.mxu0 0.0
  %1275 = vmatpush1.msra.mxu0 0.0
  %1276 = vmatprep.subr.mxu0 0.0
  %1277 = vmatpush1.msra.mxu0 0.0
  %1278 = vmatprep.subr.mxu0 0.0
  %1279 = vmatpush1.msra.mxu0 0.0
  %1280 = vmatprep.subr.mxu0 0.0
  %1281 = vmatpush1.msra.mxu0 0.0
  %1282 = vmatprep.subr.mxu0 0.0
  %1283 = vmatpush1.msra.mxu0 0.0
  %1284 = vmatprep.subr.mxu0 0.0
  %1285 = vmatpush1.msra.mxu0 0.0
  %1286 = vmatprep.subr.mxu0 0.0
  %1287 = vmatpush1.msra.mxu0 %v1266
  %1288 = vmatprep.subr.mxu0 0.0
  %1289 = vmatpush1.msra.mxu0 %v1265
  %1290 = vmatprep.subr.mxu0 0.0
  %1291 = vmatpush1.msra.mxu0 %v1264
  %1292 = vmatprep.subr.mxu0 0.0
  %1293 = vmatpush1.msra.mxu0 %v1263
  %1294 = vmatprep.subr.mxu0 0.0
  %1295 = vmatpush1.msra.mxu0 %v1262
  %1296 = vmatprep.subr.mxu0 0.0
  %1297 = vmatpush1.msra.mxu0 %v1261
  %1298 = vmatprep.subr.mxu0 0.0
  %1299 = vmatpush1.msra.mxu0 %v1260
  %1300 = vmatprep.subr.mxu0 0.0
  %1301 = vmatpush1.msra.mxu0 %v1259
  %1302 = vmatprep.subr.mxu0 0.0
  %1303 = vmatpush2.msra.mxu0 0.0
  %1304 = vmatprep.subr.mxu0 0.0
  %1305 = vmatpush2.msra.mxu0 0.0
  %1306 = vmatprep.subr.mxu0 0.0
  %1307 = vmatpush2.msra.mxu0 0.0
  %1308 = vmatprep.subr.mxu0 0.0
  %1309 = vmatpush2.msra.mxu0 0.0
  %1310 = vmatprep.subr.mxu0 0.0
  %1311 = vmatpush2.msra.mxu0 0.0
  %1312 = vmatprep.subr.mxu0 0.0
  %1313 = vmatpush2.msra.mxu0 0.0
  %1314 = vmatprep.subr.mxu0 0.0
  %1315 = vmatpush2.msra.mxu0 0.0
  %1316 = vmatprep.subr.mxu0 0.0
  %1317 = vmatpush2.msra.mxu0 0.0
  %1318 = vmatprep.subr.mxu0 0.0
  %1319 = vmatpush2.msra.mxu0 0.0
  %1320 = vmatprep.subr.mxu0 0.0
  %1321 = vmatpush2.msra.mxu0 0.0
  %1322 = vmatprep.subr.mxu0 0.0
  %1323 = vmatpush2.msra.mxu0 0.0
  %1324 = vmatprep.subr.mxu0 0.0
  %1325 = vmatpush2.msra.mxu0 0.0
  %1326 = vmatprep.subr.mxu0 0.0
  %1327 = vmatpush2.msra.mxu0 0.0
  %1328 = vmatprep.subr.mxu0 0.0
  %1329 = vmatpush2.msra.mxu0 0.0
  %1330 = vmatprep.subr.mxu0 0.0
  %1331 = vmatpush2.msra.mxu0 0.0
  %1332 = vmatprep.subr.mxu0 0.0
  %1333 = vmatpush2.msra.mxu0 0.0
  %1334 = vmatprep.mubr.f32.mxu0 0.0
  %1335 = vmatmul.mubr.f32.gmra.mxu0 %v1268
  %v1336 = vpop.f32.mrf.mxu0
  %v1337 = vadd.f32 0.0, %v1336
  %v1338 = vpop.f32.mrf.mxu0
  %1339 = vdwg.mxu0
  %v1341 = vsel %vm305, %v1108, 0
  %1343 = vmatprep.subr.mxu0 0.0
  %1344 = vmatpush1.msra.mxu0 0.0
  %1345 = vmatprep.subr.mxu0 0.0
  %1346 = vmatpush1.msra.mxu0 0.0
  %1347 = vmatprep.subr.mxu0 0.0
  %1348 = vmatpush1.msra.mxu0 0.0
  %1349 = vmatprep.subr.mxu0 0.0
  %1350 = vmatpush1.msra.mxu0 0.0
  %1351 = vmatprep.subr.mxu0 0.0
  %1352 = vmatpush1.msra.mxu0 0.0
  %1353 = vmatprep.subr.mxu0 0.0
  %1354 = vmatpush1.msra.mxu0 0.0
  %1355 = vmatprep.subr.mxu0 0.0
  %1356 = vmatpush1.msra.mxu0 0.0
  %1357 = vmatprep.subr.mxu0 0.0
  %1358 = vmatpush1.msra.mxu0 0.0
  %1359 = vmatprep.subr.mxu0 0.0
  %1360 = vmatpush1.msra.mxu0 %v1258
  %1361 = vmatprep.subr.mxu0 0.0
  %1362 = vmatpush1.msra.mxu0 %v1257
  %1363 = vmatprep.subr.mxu0 0.0
  %1364 = vmatpush1.msra.mxu0 %v1256
  %1365 = vmatprep.subr.mxu0 0.0
  %1366 = vmatpush1.msra.mxu0 %v1255
  %1367 = vmatprep.subr.mxu0 0.0
  %1368 = vmatpush1.msra.mxu0 %v1254
  %1369 = vmatprep.subr.mxu0 0.0
  %1370 = vmatpush1.msra.mxu0 %v1253
  %1371 = vmatprep.subr.mxu0 0.0
  %1372 = vmatpush1.msra.mxu0 %v1252
  %1373 = vmatprep.subr.mxu0 0.0
  %1374 = vmatpush1.msra.mxu0 %v1251
  %1375 = vmatprep.subr.mxu0 0.0
  %1376 = vmatpush2.msra.mxu0 0.0
  %1377 = vmatprep.subr.mxu0 0.0
  %1378 = vmatpush2.msra.mxu0 0.0
  %1379 = vmatprep.subr.mxu0 0.0
  %1380 = vmatpush2.msra.mxu0 0.0
  %1381 = vmatprep.subr.mxu0 0.0
  %1382 = vmatpush2.msra.mxu0 0.0
  %1383 = vmatprep.subr.mxu0 0.0
  %1384 = vmatpush2.msra.mxu0 0.0
  %1385 = vmatprep.subr.mxu0 0.0
  %1386 = vmatpush2.msra.mxu0 0.0
  %1387 = vmatprep.subr.mxu0 0.0
  %1388 = vmatpush2.msra.mxu0 0.0
  %1389 = vmatprep.subr.mxu0 0.0
  %1390 = vmatpush2.msra.mxu0 0.0
  %1391 = vmatprep.subr.mxu0 0.0
  %1392 = vmatpush2.msra.mxu0 0.0
  %1393 = vmatprep.subr.mxu0 0.0
  %1394 = vmatpush2.msra.mxu0 0.0
  %1395 = vmatprep.subr.mxu0 0.0
  %1396 = vmatpush2.msra.mxu0 0.0
  %1397 = vmatprep.subr.mxu0 0.0
  %1398 = vmatpush2.msra.mxu0 0.0
  %1399 = vmatprep.subr.mxu0 0.0
  %1400 = vmatpush2.msra.mxu0 0.0
  %1401 = vmatprep.subr.mxu0 0.0
  %1402 = vmatpush2.msra.mxu0 0.0
  %1403 = vmatprep.subr.mxu0 0.0
  %1404 = vmatpush2.msra.mxu0 0.0
  %1405 = vmatprep.subr.mxu0 0.0
  %1406 = vmatpush2.msra.mxu0 0.0
  %1407 = vmatprep.mubr.f32.mxu0 0.0
  %1408 = vmatmul.mubr.f32.gmra.mxu0 %v1341
  %v1409 = vpop.f32.mrf.mxu0
  %v1410 = vadd.f32 %v1337, %v1409
  %v1411 = vpop.f32.mrf.mxu0
  %1412 = vdwg.mxu0
  %v1413 = vld [vmem:[%s17] sm:$0xff]
  %v1414 = vld [vmem:[%s17 + $0x8] sm:$0xff]
  %v1415 = vld [vmem:[%s17 + $0x10] sm:$0xff]
  %v1416 = vld [vmem:[%s17 + $0x18] sm:$0xff]
  %v1417 = vld [vmem:[%s17 + $0x20] sm:$0xff]
  %v1418 = vld [vmem:[%s17 + $0x28] sm:$0xff]
  %v1419 = vld [vmem:[%s17 + $0x30] sm:$0xff]
  %v1420 = vld [vmem:[%s17 + $0x38] sm:$0xff]
  %v1422 = vsel %vm305, %v1248, 0
  %1424 = vmatprep.subr.mxu0 0.0
  %1425 = vmatpush1.msra.mxu0 0.0
  %1426 = vmatprep.subr.mxu0 0.0
  %1427 = vmatpush1.msra.mxu0 0.0
  %1428 = vmatprep.subr.mxu0 0.0
  %1429 = vmatpush1.msra.mxu0 0.0
  %1430 = vmatprep.subr.mxu0 0.0
  %1431 = vmatpush1.msra.mxu0 0.0
  %1432 = vmatprep.subr.mxu0 0.0
  %1433 = vmatpush1.msra.mxu0 0.0
  %1434 = vmatprep.subr.mxu0 0.0
  %1435 = vmatpush1.msra.mxu0 0.0
  %1436 = vmatprep.subr.mxu0 0.0
  %1437 = vmatpush1.msra.mxu0 0.0
  %1438 = vmatprep.subr.mxu0 0.0
  %1439 = vmatpush1.msra.mxu0 0.0
  %1440 = vmatprep.subr.mxu0 0.0
  %1441 = vmatpush1.msra.mxu0 %v1420
  %1442 = vmatprep.subr.mxu0 0.0
  %1443 = vmatpush1.msra.mxu0 %v1419
  %1444 = vmatprep.subr.mxu0 0.0
  %1445 = vmatpush1.msra.mxu0 %v1418
  %1446 = vmatprep.subr.mxu0 0.0
  %1447 = vmatpush1.msra.mxu0 %v1417
  %1448 = vmatprep.subr.mxu0 0.0
  %1449 = vmatpush1.msra.mxu0 %v1416
  %1450 = vmatprep.subr.mxu0 0.0
  %1451 = vmatpush1.msra.mxu0 %v1415
  %1452 = vmatprep.subr.mxu0 0.0
  %1453 = vmatpush1.msra.mxu0 %v1414
  %1454 = vmatprep.subr.mxu0 0.0
  %1455 = vmatpush1.msra.mxu0 %v1413
  %1456 = vmatprep.subr.mxu0 0.0
  %1457 = vmatpush2.msra.mxu0 0.0
  %1458 = vmatprep.subr.mxu0 0.0
  %1459 = vmatpush2.msra.mxu0 0.0
  %1460 = vmatprep.subr.mxu0 0.0
  %1461 = vmatpush2.msra.mxu0 0.0
  %1462 = vmatprep.subr.mxu0 0.0
  %1463 = vmatpush2.msra.mxu0 0.0
  %1464 = vmatprep.subr.mxu0 0.0
  %1465 = vmatpush2.msra.mxu0 0.0
  %1466 = vmatprep.subr.mxu0 0.0
  %1467 = vmatpush2.msra.mxu0 0.0
  %1468 = vmatprep.subr.mxu0 0.0
  %1469 = vmatpush2.msra.mxu0 0.0
  %1470 = vmatprep.subr.mxu0 0.0
  %1471 = vmatpush2.msra.mxu0 0.0
  %1472 = vmatprep.subr.mxu0 0.0
  %1473 = vmatpush2.msra.mxu0 0.0
  %1474 = vmatprep.subr.mxu0 0.0
  %1475 = vmatpush2.msra.mxu0 0.0
  %1476 = vmatprep.subr.mxu0 0.0
  %1477 = vmatpush2.msra.mxu0 0.0
  %1478 = vmatprep.subr.mxu0 0.0
  %1479 = vmatpush2.msra.mxu0 0.0
  %1480 = vmatprep.subr.mxu0 0.0
  %1481 = vmatpush2.msra.mxu0 0.0
  %1482 = vmatprep.subr.mxu0 0.0
  %1483 = vmatpush2.msra.mxu0 0.0
  %1484 = vmatprep.subr.mxu0 0.0
  %1485 = vmatpush2.msra.mxu0 0.0
  %1486 = vmatprep.subr.mxu0 0.0
  %1487 = vmatpush2.msra.mxu0 0.0
  %1488 = vmatprep.mubr.f32.mxu0 0.0
  %1489 = vmatmul.mubr.f32.gmra.mxu0 %v1422
  %v1490 = vpop.f32.mrf.mxu0
  %v1491 = vadd.f32 0.0, %v1490
  %v1492 = vpop.f32.mrf.mxu0
  %1493 = vdwg.mxu0
  %v1494 = vadd.f32 %v1410, %v1491
  %v1495 = vld [vmem:[%s18] sm:$0x1]
  %v1497 = vlaneseq
  %v1498 = vshrl.u32 %v1497, 7
  %v1499 = vsub.s32 0, %v1498
  %v1500 = vrot.slane %v1495, %v1499
  %v1502 = vadd.f32 %v1494, %v1500
  %v1503 = vmax.f32 %v1502, 0.0
  %v1504 = vld [vmem:[%s19] sm:$0xff]
  %v1505 = vld [vmem:[%s19 + $0x8] sm:$0xff]
  %v1506 = vld [vmem:[%s19 + $0x10] sm:$0xff]
  %v1507 = vld [vmem:[%s19 + $0x18] sm:$0xff]
  %v1508 = vld [vmem:[%s19 + $0x20] sm:$0xff]
  %v1509 = vld [vmem:[%s19 + $0x28] sm:$0xff]
  %v1510 = vld [vmem:[%s19 + $0x30] sm:$0xff]
  %v1511 = vld [vmem:[%s19 + $0x38] sm:$0xff]
  %v1512 = vld [vmem:[%s19 + $0x40] sm:$0xff]
  %v1513 = vld [vmem:[%s19 + $0x48] sm:$0xff]
  %v1514 = vld [vmem:[%s19 + $0x50] sm:$0xff]
  %v1515 = vld [vmem:[%s19 + $0x58] sm:$0xff]
  %v1516 = vld [vmem:[%s19 + $0x60] sm:$0xff]
  %v1517 = vld [vmem:[%s19 + $0x68] sm:$0xff]
  %v1518 = vld [vmem:[%s19 + $0x70] sm:$0xff]
  %v1519 = vld [vmem:[%s19 + $0x78] sm:$0xff]
  %v1520 = vld [vmem:[%s20] sm:$0x1]
  %v1522 = vlaneseq
  %v1523 = vshrl.u32 %v1522, 7
  %v1524 = vsub.s32 0, %v1523
  %v1525 = vrot.slane %v1520, %v1524
  %1527 = vmatprep.subr.mxu0 0.0
  %1528 = vmatpush1.msra.mxu0 %v1519
  %1529 = vmatprep.subr.mxu0 0.0
  %1530 = vmatpush1.msra.mxu0 %v1518
  %1531 = vmatprep.subr.mxu0 0.0
  %1532 = vmatpush1.msra.mxu0 %v1517
  %1533 = vmatprep.subr.mxu0 0.0
  %1534 = vmatpush1.msra.mxu0 %v1516
  %1535 = vmatprep.subr.mxu0 0.0
  %1536 = vmatpush1.msra.mxu0 %v1515
  %1537 = vmatprep.subr.mxu0 0.0
  %1538 = vmatpush1.msra.mxu0 %v1514
  %1539 = vmatprep.subr.mxu0 0.0
  %1540 = vmatpush1.msra.mxu0 %v1513
  %1541 = vmatprep.subr.mxu0 0.0
  %1542 = vmatpush1.msra.mxu0 %v1512
  %1543 = vmatprep.subr.mxu0 0.0
  %1544 = vmatpush1.msra.mxu0 %v1511
  %1545 = vmatprep.subr.mxu0 0.0
  %1546 = vmatpush1.msra.mxu0 %v1510
  %1547 = vmatprep.subr.mxu0 0.0
  %1548 = vmatpush1.msra.mxu0 %v1509
  %1549 = vmatprep.subr.mxu0 0.0
  %1550 = vmatpush1.msra.mxu0 %v1508
  %1551 = vmatprep.subr.mxu0 0.0
  %1552 = vmatpush1.msra.mxu0 %v1507
  %1553 = vmatprep.subr.mxu0 0.0
  %1554 = vmatpush1.msra.mxu0 %v1506
  %1555 = vmatprep.subr.mxu0 0.0
  %1556 = vmatpush1.msra.mxu0 %v1505
  %1557 = vmatprep.subr.mxu0 0.0
  %1558 = vmatpush1.msra.mxu0 %v1504
  %1559 = vmatprep.subr.mxu0 0.0
  %1560 = vmatpush2.msra.mxu0 0.0
  %1561 = vmatprep.subr.mxu0 0.0
  %1562 = vmatpush2.msra.mxu0 0.0
  %1563 = vmatprep.subr.mxu0 0.0
  %1564 = vmatpush2.msra.mxu0 0.0
  %1565 = vmatprep.subr.mxu0 0.0
  %1566 = vmatpush2.msra.mxu0 0.0
  %1567 = vmatprep.subr.mxu0 0.0
  %1568 = vmatpush2.msra.mxu0 0.0
  %1569 = vmatprep.subr.mxu0 0.0
  %1570 = vmatpush2.msra.mxu0 0.0
  %1571 = vmatprep.subr.mxu0 0.0
  %1572 = vmatpush2.msra.mxu0 0.0
  %1573 = vmatprep.subr.mxu0 0.0
  %1574 = vmatpush2.msra.mxu0 0.0
  %1575 = vmatprep.subr.mxu0 0.0
  %1576 = vmatpush2.msra.mxu0 0.0
  %1577 = vmatprep.subr.mxu0 0.0
  %1578 = vmatpush2.msra.mxu0 0.0
  %1579 = vmatprep.subr.mxu0 0.0
  %1580 = vmatpush2.msra.mxu0 0.0
  %1581 = vmatprep.subr.mxu0 0.0
  %1582 = vmatpush2.msra.mxu0 0.0
  %1583 = vmatprep.subr.mxu0 0.0
  %1584 = vmatpush2.msra.mxu0 0.0
  %1585 = vmatprep.subr.mxu0 0.0
  %1586 = vmatpush2.msra.mxu0 0.0
  %1587 = vmatprep.subr.mxu0 0.0
  %1588 = vmatpush2.msra.mxu0 0.0
  %1589 = vmatprep.subr.mxu0 0.0
  %1590 = vmatpush2.msra.mxu0 0.0
  %1591 = vmatprep.mubr.f32.mxu0 0.0
  %1592 = vmatmul.mubr.f32.gmra.mxu0 %v1503
  %v1593 = vpop.f32.mrf.mxu0
  %v1594 = vadd.f32 %v1525, %v1593
  %v1595 = vpop.f32.mrf.mxu0
  %1596 = vdwg.mxu0
  %1597 = vst [vmem:[%s21] sm:$0xff] %v1594
  // Predicated region
  $region86: #{gin_forward.1} parent=0 // pred_check
    _
  $region87: #{gin_forward.1} parent=0 // pred_check_branch
    %1599 = sbr.rel (0) target = $region89
  $region88: #{gin_forward.1} parent=0 // pred_region
    _
  $region89: #{gin_forward.1} parent=0 // pred_fallthru
    _
  // Predicated region
  $region90: #{gin_forward.1} parent=0 // pred_check
    _
  $region91: #{gin_forward.1} parent=0 // pred_check_branch
    %1601 = sbr.rel (0) target = $region93
  $region92: #{gin_forward.1} parent=0 // pred_region
    _
  $region93: #{gin_forward.1} parent=0 // pred_fallthru
    _

</llo_original>
